<compile_context>
chip_gen: v7x
topology: tpu7x:2x2x1
jax: 0.10.0
libtpu: 0.0.40
codegen_flags: <defaults>
</compile_context>

<pallas_src>
import jax
import jax.numpy as jnp
from jax.experimental import pallas as pl
from jax.experimental.pallas import tpu as pltpu

LANE = 128


def _round_up(x, m):
    return (x + m - 1) // m * m


def qnetwork_kernel(x_ref, w1_ref, b1_ref, w2_ref, b2_ref, w3_ref, b3_ref, o_ref):
    """Fused 3-layer MLP on one batch tile: relu(x@W1+b1) -> relu(@W2+b2) -> @W3+b3."""
    x = x_ref[...]
    h1 = jnp.dot(x, w1_ref[...], preferred_element_type=jnp.float32) + b1_ref[...]
    h1 = jnp.maximum(h1, 0.0)
    h2 = jnp.dot(h1.astype(w2_ref.dtype), w2_ref[...],
                 preferred_element_type=jnp.float32) + b2_ref[...]
    h2 = jnp.maximum(h2, 0.0)
    q = jnp.dot(h2.astype(w3_ref.dtype), w3_ref[...],
                preferred_element_type=jnp.float32) + b3_ref[...]
    o_ref[...] = q.astype(o_ref.dtype)


def prepare_params(params, compute_dtype=jnp.float32):
    """Pad/cast the weights ONCE (hoisted out of the per-step forward).

    Zero-padding hidden/output widths to the 128-lane boundary preserves the
    math exactly: padded units have zero weights + zero bias -> relu(0)=0 ->
    contribute nothing to the next layer; padded output columns are sliced off.
    """
    S, F1 = params["w1"].shape
    F2 = params["w2"].shape[1]
    A = params["w3"].shape[1]
    F1p = _round_up(F1, LANE)
    F2p = _round_up(F2, LANE)
    Ap = _round_up(A, LANE)

    def pad2(a, r, c):
        return jnp.pad(a, ((0, r - a.shape[0]), (0, c - a.shape[1])))

    return {
        "w1": pad2(params["w1"], S, F1p).astype(compute_dtype),
        "b1": pad2(params["b1"], 1, F1p).astype(jnp.float32),
        "w2": pad2(params["w2"], F1p, F2p).astype(compute_dtype),
        "b2": pad2(params["b2"], 1, F2p).astype(jnp.float32),
        "w3": pad2(params["w3"], F2p, Ap).astype(compute_dtype),
        "b3": pad2(params["b3"], 1, Ap).astype(jnp.float32),
        "state_size": S,
        "action_size": A,
        "compute_dtype": jnp.dtype(compute_dtype),
    }


def qnetwork_forward(state, prep, *, tile_b=1024, split_for_megacore=False,
                     out_dtype=jnp.float32):
    """QNetwork forward pass via one batch-gridded Pallas TPU kernel.

    state: (B, state_size) float32.
    prep:  output of prepare_params() (padded/cast weight pytree, cached by
           the caller — do not rebuild it every step).
    tile_b: batch tile (bigger = fewer grid steps; VMEM is never the limiter
            here at any generation, including v7x's 64 MiB).
    split_for_megacore: keep >= 2 grid steps so v7x's 2 TensorCores both get
            work; leave False on v5e/v6e (1 TC).
    out_dtype: f32 (exact) or bf16 (halves the padded-output writeback).
    """
    B, S = state.shape
    assert S == prep["state_size"], "state width != prepared params"
    compute_dtype = prep["compute_dtype"]
    A = prep["action_size"]
    F1p = prep["w1"].shape[1]
    F2p = prep["w2"].shape[1]
    Ap = prep["w3"].shape[1]

    # Sublane multiple for the batch tile: bf16 packs 16 rows/vreg, f32 packs 8.
    sub = 16 if compute_dtype == jnp.bfloat16 else 8

    # Tile selection: biggest tile (amortizes ~0.35us/grid-step), rounded to a
    # sublane multiple so odd user values can't break the (8,128) constraint.
    tile_b = max(sub, min(int(tile_b), _round_up(B, sub)))
    tile_b = _round_up(tile_b, sub)
    if split_for_megacore and _round_up(B, sub) > sub:
        # v7x: cap the tile so the grid has >= 2 (parallel) steps.
        tile_b = max(sub, min(tile_b, _round_up(_round_up(B, sub) // 2, sub)))
    Bp = _round_up(B, tile_b)

    x = state if Bp == B else jnp.pad(state, ((0, Bp - B), (0, 0)))
    x = x.astype(compute_dtype)

    grid = (Bp // tile_b,)
    const = lambda i: (0, 0)  # weights/biases resident in VMEM, DMA'd once

    cdt_bytes = jnp.dtype(compute_dtype).itemsize
    out_bytes = jnp.dtype(out_dtype).itemsize
    cost = pl.CostEstimate(
        flops=2 * Bp * (S * F1p + F1p * F2p + F2p * Ap),
        transcendentals=0,
        bytes_accessed=(x.size + prep["w1"].size + prep["w2"].size
                        + prep["w3"].size) * cdt_bytes
        + (prep["b1"].size + prep["b2"].size + prep["b3"].size) * 4
        + Bp * Ap * out_bytes,
    )

    def _call(buffer_weights_once):
        # Constant-index weight refs: request single buffering (DMA once, no
        # second buffer / revisit bookkeeping).
        wkw = {"pipeline_mode": pl.Buffered(1)} if buffer_weights_once else {}
        return pl.pallas_call(
            qnetwork_kernel,
            out_shape=jax.ShapeDtypeStruct((Bp, Ap), out_dtype),
            grid=grid,
            in_specs=[
                pl.BlockSpec((tile_b, S), lambda i: (i, 0)),  # streamed batch tile
                pl.BlockSpec((S, F1p), const, **wkw),
                pl.BlockSpec((1, F1p), const, **wkw),
                pl.BlockSpec((F1p, F2p), const, **wkw),
                pl.BlockSpec((1, F2p), const, **wkw),
                pl.BlockSpec((F2p, Ap), const, **wkw),
                pl.BlockSpec((1, Ap), const, **wkw),
            ],
            out_specs=pl.BlockSpec((tile_b, Ap), lambda i: (i, 0)),  # lane-dense
            compiler_params=pltpu.CompilerParams(
                dimension_semantics=("parallel",),
            ),
            cost_estimate=cost,
        )(x, prep["w1"], prep["b1"], prep["w2"], prep["b2"], prep["w3"], prep["b3"])

    try:
        out = _call(True)
    except Exception:  # pipeline_mode unsupported in this JAX build -> plain specs
        out = _call(False)

    return out[:B, :A].astype(jnp.float32)


def init_params(key, state_size, action_size, fc1_units=64, fc2_units=64):
    """Deterministic init mimicking torch.nn.Linear (uniform +-1/sqrt(fan_in))."""
    ks = jax.random.split(key, 6)

    def linear(kw, kb, fan_in, fan_out):
        bound = 1.0 / jnp.sqrt(jnp.float32(fan_in))
        w = jax.random.uniform(kw, (fan_in, fan_out), jnp.float32, -bound, bound)
        b = jax.random.uniform(kb, (1, fan_out), jnp.float32, -bound, bound)
        return w, b

    w1, b1 = linear(ks[0], ks[1], state_size, fc1_units)
    w2, b2 = linear(ks[2], ks[3], fc1_units, fc2_units)
    w3, b3 = linear(ks[4], ks[5], fc2_units, action_size)
    return {"w1": w1, "b1": b1, "w2": w2, "b2": b2, "w3": w3, "b3": b3}


def qnetwork_ref(state, p):
    """Pure-JAX reference for the correctness check."""
    h1 = jnp.maximum(state @ p["w1"] + p["b1"], 0.0)
    h2 = jnp.maximum(h1 @ p["w2"] + p["b2"], 0.0)
    return h2 @ p["w3"] + p["b3"]


if __name__ == "__main__":
    # LunarLander-v2: state_size=8, action_size=4; small batch.
    state_size, action_size = 8, 4
    batch = 16

    key = jax.random.PRNGKey(0)
    k_params, k_state = jax.random.split(key)
    params = init_params(k_params, state_size, action_size)
    state = jax.random.normal(k_state, (batch, state_size), jnp.float32)
    q_ref = qnetwork_ref(state, params)

    # Weights padded/cast once (hoisted), reused across all forward calls.
    prep = prepare_params(params)

    # (1) Small tile -> multi-step batch grid (grid=(2,)), exercises pipelining.
    q = jax.block_until_ready(qnetwork_forward(state, prep, tile_b=8))
    assert q.shape == (batch, action_size)
    assert jnp.allclose(q, q_ref, atol=1e-5, rtol=1e-5), "mismatch (tiled grid)"

    # (2) Default fat tile (clamped to the padded batch -> grid=(1,)).
    q_big = jax.block_until_ready(qnetwork_forward(state, prep))
    assert jnp.allclose(q_big, q_ref, atol=1e-5, rtol=1e-5), "mismatch (fat tile)"

    # (3) v7x-style megacore split: grid length forced >= 2.
    q_mc = jax.block_until_ready(
        qnetwork_forward(state, prep, split_for_megacore=True))
    assert jnp.allclose(q_mc, q_ref, atol=1e-5, rtol=1e-5), "mismatch (megacore)"

    # (4) bf16 MXU-operand path (v6e/v7x opt-in; looser tolerance expected).
    prep_bf16 = prepare_params(params, compute_dtype=jnp.bfloat16)
    q_bf16 = jax.block_until_ready(
        qnetwork_forward(state, prep_bf16, tile_b=16))
    assert jnp.allclose(q_bf16, q_ref, atol=5e-2, rtol=5e-2), "bf16 path mismatch"

    print("KERNEL_OK")
</pallas_src>

<mosaic_0001>
module attributes {stable_mosaic.version = 11 : i64} {
  func.func @qnetwork_kernel(%arg0: i32, %arg1: memref<8x8xf32, #tpu.memory_space<vmem>>, %arg2: memref<8x128xf32, #tpu.memory_space<vmem>>, %arg3: memref<1x128xf32, #tpu.memory_space<vmem>>, %arg4: memref<128x128xf32, #tpu.memory_space<vmem>>, %arg5: memref<1x128xf32, #tpu.memory_space<vmem>>, %arg6: memref<128x128xf32, #tpu.memory_space<vmem>>, %arg7: memref<1x128xf32, #tpu.memory_space<vmem>>, %arg8: memref<8x128xf32, #tpu.memory_space<vmem>>) attributes {dimension_semantics = [#tpu.dimension_semantics<parallel>], iteration_bounds = array<i64: 2>, scalar_prefetch = 0 : i64, scratch_operands = 0 : i64, tpu.core_type = #tpu.core_type<tc>, window_params = [{transform_indices = @transform_0, window_bounds = array<i64: 8, 8>}, {pipeline_mode = #tpu.pipeline_mode<synchronous>, transform_indices = @transform_1, window_bounds = array<i64: 8, 128>}, {pipeline_mode = #tpu.pipeline_mode<synchronous>, transform_indices = @transform_2, window_bounds = array<i64: 1, 128>}, {pipeline_mode = #tpu.pipeline_mode<synchronous>, transform_indices = @transform_3, window_bounds = array<i64: 128, 128>}, {pipeline_mode = #tpu.pipeline_mode<synchronous>, transform_indices = @transform_4, window_bounds = array<i64: 1, 128>}, {pipeline_mode = #tpu.pipeline_mode<synchronous>, transform_indices = @transform_5, window_bounds = array<i64: 128, 128>}, {pipeline_mode = #tpu.pipeline_mode<synchronous>, transform_indices = @transform_6, window_bounds = array<i64: 1, 128>}, {transform_indices = @transform_7, window_bounds = array<i64: 8, 128>}]} {
    %c0 = arith.constant 0 : index
    %c0_0 = arith.constant 0 : index
    %0 = vector.load %arg1[%c0, %c0_0] : memref<8x8xf32, #tpu.memory_space<vmem>>, vector<8x8xf32>
    %c0_1 = arith.constant 0 : index
    %c0_2 = arith.constant 0 : index
    %1 = vector.load %arg2[%c0_1, %c0_2] : memref<8x128xf32, #tpu.memory_space<vmem>>, vector<8x128xf32>
    %cst = arith.constant dense<0.000000e+00> : vector<8x128xf32>
    %2 = tpu.matmul %0, %1, %cst {dimension_numbers = #tpu.dot_dimension_numbers<[1], [0], [0], [1], [0, 0, 1, 1], [], []>} : vector<8x8xf32>, vector<8x128xf32>, vector<8x128xf32> -> vector<8x128xf32>
    %c0_3 = arith.constant 0 : index
    %c0_4 = arith.constant 0 : index
    %3 = vector.load %arg3[%c0_3, %c0_4] : memref<1x128xf32, #tpu.memory_space<vmem>>, vector<1x128xf32>
    %4 = vector.broadcast %3 : vector<1x128xf32> to vector<8x128xf32>
    %5 = arith.addf %2, %4 : vector<8x128xf32>
    %cst_5 = arith.constant 0.000000e+00 : f32
    %6 = vector.broadcast %cst_5 : f32 to vector<8x128xf32>
    %7 = arith.maximumf %5, %6 : vector<8x128xf32>
    %c0_6 = arith.constant 0 : index
    %c0_7 = arith.constant 0 : index
    %8 = vector.load %arg4[%c0_6, %c0_7] : memref<128x128xf32, #tpu.memory_space<vmem>>, vector<128x128xf32>
    %cst_8 = arith.constant dense<0.000000e+00> : vector<8x128xf32>
    %9 = tpu.matmul %7, %8, %cst_8 {dimension_numbers = #tpu.dot_dimension_numbers<[1], [0], [0], [1], [0, 0, 1, 1], [], []>} : vector<8x128xf32>, vector<128x128xf32>, vector<8x128xf32> -> vector<8x128xf32>
    %c0_9 = arith.constant 0 : index
    %c0_10 = arith.constant 0 : index
    %10 = vector.load %arg5[%c0_9, %c0_10] : memref<1x128xf32, #tpu.memory_space<vmem>>, vector<1x128xf32>
    %11 = vector.broadcast %10 : vector<1x128xf32> to vector<8x128xf32>
    %12 = arith.addf %9, %11 : vector<8x128xf32>
    %cst_11 = arith.constant 0.000000e+00 : f32
    %13 = vector.broadcast %cst_11 : f32 to vector<8x128xf32>
    %14 = arith.maximumf %12, %13 : vector<8x128xf32>
    %c0_12 = arith.constant 0 : index
    %c0_13 = arith.constant 0 : index
    %15 = vector.load %arg6[%c0_12, %c0_13] : memref<128x128xf32, #tpu.memory_space<vmem>>, vector<128x128xf32>
    %cst_14 = arith.constant dense<0.000000e+00> : vector<8x128xf32>
    %16 = tpu.matmul %14, %15, %cst_14 {dimension_numbers = #tpu.dot_dimension_numbers<[1], [0], [0], [1], [0, 0, 1, 1], [], []>} : vector<8x128xf32>, vector<128x128xf32>, vector<8x128xf32> -> vector<8x128xf32>
    %c0_15 = arith.constant 0 : index
    %c0_16 = arith.constant 0 : index
    %17 = vector.load %arg7[%c0_15, %c0_16] : memref<1x128xf32, #tpu.memory_space<vmem>>, vector<1x128xf32>
    %18 = vector.broadcast %17 : vector<1x128xf32> to vector<8x128xf32>
    %19 = arith.addf %16, %18 : vector<8x128xf32>
    %c0_17 = arith.constant 0 : index
    %c0_18 = arith.constant 0 : index
    %20 = vector.load %arg8[%c0_17, %c0_18] : memref<8x128xf32, #tpu.memory_space<vmem>>, vector<8x128xf32>
    tpu.vector_store %arg8[%c0_17, %c0_18], %19 {strides = array<i32>} : memref<8x128xf32, #tpu.memory_space<vmem>>, vector<8x128xf32>,
    return
  }
  func.func @transform_0(%arg0: i32) -> (i32, i32) {
    %c0_i32 = arith.constant 0 : i32
    %c0_i32_0 = arith.constant 0 : i32
    return %arg0, %c0_i32 : i32, i32
  }
  func.func @transform_1(%arg0: i32) -> (i32, i32) {
    %c0_i32 = arith.constant 0 : i32
    %c0_i32_0 = arith.constant 0 : i32
    %c0_i32_1 = arith.constant 0 : i32
    return %c0_i32, %c0_i32_0 : i32, i32
  }
  func.func @transform_2(%arg0: i32) -> (i32, i32) {
    %c0_i32 = arith.constant 0 : i32
    %c0_i32_0 = arith.constant 0 : i32
    %c0_i32_1 = arith.constant 0 : i32
    return %c0_i32, %c0_i32_0 : i32, i32
  }
  func.func @transform_3(%arg0: i32) -> (i32, i32) {
    %c0_i32 = arith.constant 0 : i32
    %c0_i32_0 = arith.constant 0 : i32
    %c0_i32_1 = arith.constant 0 : i32
    return %c0_i32, %c0_i32_0 : i32, i32
  }
  func.func @transform_4(%arg0: i32) -> (i32, i32) {
    %c0_i32 = arith.constant 0 : i32
    %c0_i32_0 = arith.constant 0 : i32
    %c0_i32_1 = arith.constant 0 : i32
    return %c0_i32, %c0_i32_0 : i32, i32
  }
  func.func @transform_5(%arg0: i32) -> (i32, i32) {
    %c0_i32 = arith.constant 0 : i32
    %c0_i32_0 = arith.constant 0 : i32
    %c0_i32_1 = arith.constant 0 : i32
    return %c0_i32, %c0_i32_0 : i32, i32
  }
  func.func @transform_6(%arg0: i32) -> (i32, i32) {
    %c0_i32 = arith.constant 0 : i32
    %c0_i32_0 = arith.constant 0 : i32
    %c0_i32_1 = arith.constant 0 : i32
    return %c0_i32, %c0_i32_0 : i32, i32
  }
  func.func @transform_7(%arg0: i32) -> (i32, i32) {
    %c0_i32 = arith.constant 0 : i32
    %c0_i32_0 = arith.constant 0 : i32
    return %arg0, %c0_i32 : i32, i32
  }
}

module attributes {stable_mosaic.version = 11 : i64} {
  func.func @qnetwork_kernel(%arg0: i32, %arg1: memref<8x8xf32, #tpu.memory_space<vmem>>, %arg2: memref<8x128xf32, #tpu.memory_space<vmem>>, %arg3: memref<1x128xf32, #tpu.memory_space<vmem>>, %arg4: memref<128x128xf32, #tpu.memory_space<vmem>>, %arg5: memref<1x128xf32, #tpu.memory_space<vmem>>, %arg6: memref<128x128xf32, #tpu.memory_space<vmem>>, %arg7: memref<1x128xf32, #tpu.memory_space<vmem>>, %arg8: memref<8x128xf32, #tpu.memory_space<vmem>>) attributes {dimension_semantics = [#tpu.dimension_semantics<parallel>], iteration_bounds = array<i64: 2>, scalar_prefetch = 0 : i64, scratch_operands = 0 : i64, tpu.core_type = #tpu.core_type<tc>, window_params = [{transform_indices = @transform_0, window_bounds = array<i64: 8, 8>}, {pipeline_mode = #tpu.pipeline_mode<synchronous>, transform_indices = @transform_1, window_bounds = array<i64: 8, 128>}, {pipeline_mode = #tpu.pipeline_mode<synchronous>, transform_indices = @transform_2, window_bounds = array<i64: 1, 128>}, {pipeline_mode = #tpu.pipeline_mode<synchronous>, transform_indices = @transform_3, window_bounds = array<i64: 128, 128>}, {pipeline_mode = #tpu.pipeline_mode<synchronous>, transform_indices = @transform_4, window_bounds = array<i64: 1, 128>}, {pipeline_mode = #tpu.pipeline_mode<synchronous>, transform_indices = @transform_5, window_bounds = array<i64: 128, 128>}, {pipeline_mode = #tpu.pipeline_mode<synchronous>, transform_indices = @transform_6, window_bounds = array<i64: 1, 128>}, {transform_indices = @transform_7, window_bounds = array<i64: 8, 128>}]} {
    %c0 = arith.constant 0 : index
    %c0_0 = arith.constant 0 : index
    %0 = vector.load %arg1[%c0, %c0_0] : memref<8x8xf32, #tpu.memory_space<vmem>>, vector<8x8xf32>
    %c0_1 = arith.constant 0 : index
    %c0_2 = arith.constant 0 : index
    %1 = vector.load %arg2[%c0_1, %c0_2] : memref<8x128xf32, #tpu.memory_space<vmem>>, vector<8x128xf32>
    %cst = arith.constant dense<0.000000e+00> : vector<8x128xf32>
    %2 = tpu.matmul %0, %1, %cst {dimension_numbers = #tpu.dot_dimension_numbers<[1], [0], [0], [1], [0, 0, 1, 1], [], []>} : vector<8x8xf32>, vector<8x128xf32>, vector<8x128xf32> -> vector<8x128xf32>
    %c0_3 = arith.constant 0 : index
    %c0_4 = arith.constant 0 : index
    %3 = vector.load %arg3[%c0_3, %c0_4] : memref<1x128xf32, #tpu.memory_space<vmem>>, vector<1x128xf32>
    %4 = vector.broadcast %3 : vector<1x128xf32> to vector<8x128xf32>
    %5 = arith.addf %2, %4 : vector<8x128xf32>
    %cst_5 = arith.constant 0.000000e+00 : f32
    %6 = vector.broadcast %cst_5 : f32 to vector<8x128xf32>
    %7 = arith.maximumf %5, %6 : vector<8x128xf32>
    %c0_6 = arith.constant 0 : index
    %c0_7 = arith.constant 0 : index
    %8 = vector.load %arg4[%c0_6, %c0_7] : memref<128x128xf32, #tpu.memory_space<vmem>>, vector<128x128xf32>
    %cst_8 = arith.constant dense<0.000000e+00> : vector<8x128xf32>
    %9 = tpu.matmul %7, %8, %cst_8 {dimension_numbers = #tpu.dot_dimension_numbers<[1], [0], [0], [1], [0, 0, 1, 1], [], []>} : vector<8x128xf32>, vector<128x128xf32>, vector<8x128xf32> -> vector<8x128xf32>
    %c0_9 = arith.constant 0 : index
    %c0_10 = arith.constant 0 : index
    %10 = vector.load %arg5[%c0_9, %c0_10] : memref<1x128xf32, #tpu.memory_space<vmem>>, vector<1x128xf32>
    %11 = vector.broadcast %10 : vector<1x128xf32> to vector<8x128xf32>
    %12 = arith.addf %9, %11 : vector<8x128xf32>
    %cst_11 = arith.constant 0.000000e+00 : f32
    %13 = vector.broadcast %cst_11 : f32 to vector<8x128xf32>
    %14 = arith.maximumf %12, %13 : vector<8x128xf32>
    %c0_12 = arith.constant 0 : index
    %c0_13 = arith.constant 0 : index
    %15 = vector.load %arg6[%c0_12, %c0_13] : memref<128x128xf32, #tpu.memory_space<vmem>>, vector<128x128xf32>
    %cst_14 = arith.constant dense<0.000000e+00> : vector<8x128xf32>
    %16 = tpu.matmul %14, %15, %cst_14 {dimension_numbers = #tpu.dot_dimension_numbers<[1], [0], [0], [1], [0, 0, 1, 1], [], []>} : vector<8x128xf32>, vector<128x128xf32>, vector<8x128xf32> -> vector<8x128xf32>
    %c0_15 = arith.constant 0 : index
    %c0_16 = arith.constant 0 : index
    %17 = vector.load %arg7[%c0_15, %c0_16] : memref<1x128xf32, #tpu.memory_space<vmem>>, vector<1x128xf32>
    %18 = vector.broadcast %17 : vector<1x128xf32> to vector<8x128xf32>
    %19 = arith.addf %16, %18 : vector<8x128xf32>
    %c0_17 = arith.constant 0 : index
    %c0_18 = arith.constant 0 : index
    %20 = vector.load %arg8[%c0_17, %c0_18] : memref<8x128xf32, #tpu.memory_space<vmem>>, vector<8x128xf32>
    tpu.vector_store %arg8[%c0_17, %c0_18], %19 {strides = array<i32>} : memref<8x128xf32, #tpu.memory_space<vmem>>, vector<8x128xf32>,
    return
  }
  func.func @transform_0(%arg0: i32) -> (i32, i32) {
    %c0_i32 = arith.constant 0 : i32
    %c0_i32_0 = arith.constant 0 : i32
    return %arg0, %c0_i32 : i32, i32
  }
  func.func @transform_1(%arg0: i32) -> (i32, i32) {
    %c0_i32 = arith.constant 0 : i32
    %c0_i32_0 = arith.constant 0 : i32
    %c0_i32_1 = arith.constant 0 : i32
    return %c0_i32, %c0_i32_0 : i32, i32
  }
  func.func @transform_2(%arg0: i32) -> (i32, i32) {
    %c0_i32 = arith.constant 0 : i32
    %c0_i32_0 = arith.constant 0 : i32
    %c0_i32_1 = arith.constant 0 : i32
    return %c0_i32, %c0_i32_0 : i32, i32
  }
  func.func @transform_3(%arg0: i32) -> (i32, i32) {
    %c0_i32 = arith.constant 0 : i32
    %c0_i32_0 = arith.constant 0 : i32
    %c0_i32_1 = arith.constant 0 : i32
    return %c0_i32, %c0_i32_0 : i32, i32
  }
  func.func @transform_4(%arg0: i32) -> (i32, i32) {
    %c0_i32 = arith.constant 0 : i32
    %c0_i32_0 = arith.constant 0 : i32
    %c0_i32_1 = arith.constant 0 : i32
    return %c0_i32, %c0_i32_0 : i32, i32
  }
  func.func @transform_5(%arg0: i32) -> (i32, i32) {
    %c0_i32 = arith.constant 0 : i32
    %c0_i32_0 = arith.constant 0 : i32
    %c0_i32_1 = arith.constant 0 : i32
    return %c0_i32, %c0_i32_0 : i32, i32
  }
  func.func @transform_6(%arg0: i32) -> (i32, i32) {
    %c0_i32 = arith.constant 0 : i32
    %c0_i32_0 = arith.constant 0 : i32
    %c0_i32_1 = arith.constant 0 : i32
    return %c0_i32, %c0_i32_0 : i32, i32
  }
  func.func @transform_7(%arg0: i32) -> (i32, i32) {
    %c0_i32 = arith.constant 0 : i32
    %c0_i32_0 = arith.constant 0 : i32
    return %arg0, %c0_i32 : i32, i32
  }
}

</mosaic_0001>

<llo_original>
// kernel: tpu_custom_call.1
$region0: #{tpu_custom_call.1}
  #allocation0 [shape = 'u32[]', space=smem, size = 0x4, offset = 0x4, fixed_abs, tag = 'smem constant byte address 0x4 - core index']
  #allocation1 [shape = 'u32[144,128]{1,0:T(1,128)}', space=vmem, size = 0x12000, scoped, tag = 'internal scratch']
  %s0 = inlined_call_operand.vmem [shape: f32[16,8], index: 0, kind: input, shape index: {}]
  %s1 = inlined_call_operand.vmem [shape: f32[8,128], index: 1, kind: input, shape index: {}]
  %s2 = inlined_call_operand.vmem [shape: f32[1,128], index: 2, kind: input, shape index: {}]
  %s3 = inlined_call_operand.hbm [shape: f32[128,128], index: 3, kind: input, shape index: {}]
  %s4 = inlined_call_operand.vmem [shape: f32[1,128], index: 4, kind: input, shape index: {}]
  %s5 = inlined_call_operand.hbm [shape: f32[128,128], index: 5, kind: input, shape index: {}]
  %s6 = inlined_call_operand.vmem [shape: f32[1,128], index: 6, kind: input, shape index: {}]
  %s7 = inlined_call_operand.hbm [shape: f32[16,128], index: 7, kind: output, shape index: {}]
  %s8 = sld [smem:[#allocation0]]
  $region69: #{tpu_custom_call.1} parent=0
    _
  %s10 = ssub.s32 1, %s8
  %s11 = scalar_select 0, %s10, %s8
  $region1: #{tpu_custom_call.1} parent=0
    #allocation2 [shape = 'u8[65536]{0}', space=vmem, size = 0x10000, scoped, tag = 'input window, operand 3, single buffered']
    #allocation3 [shape = 's32[2]{0}', space=sflag, size = 0x8, scoped, tag = 'scoped memory for tpu_custom_call.1']
    #allocation4 [shape = 's32[2]{0}', space=sflag, size = 0x8, scoped, tag = 'scoped memory for tpu_custom_call.1']
    #allocation5 [shape = 'u8[65536]{0}', space=vmem, size = 0x10000, scoped, tag = 'input window, operand 5, single buffered']
    #allocation6 [shape = 's32[1]{0}', space=sflag, size = 0x4, scoped, tag = 'scoped memory for tpu_custom_call.1']
    #allocation7 [shape = 'u8[8192]{0}', space=vmem, size = 0x2000, scoped, tag = 'output window, operand 0']
    %12 = vsyncpa [#allocation3], 0
    %13 = vsyncpa [#allocation6], 0
    %14 = vsyncpa [#allocation4], 0
    %s15 = scalar_lea.sflag [#allocation4], 1
    %16 = vsyncpa %s15, 0
    loop: start=0, step=1, limit=4
    $region2: #{tpu_custom_call.1} parent=1 // loop_pre_header
      _
    $region3: #{tpu_custom_call.1} parent=1 // loop_header
      %s18 = sphi 0, %s22
      %p19 = scmp.ge.s32.totalorder %s18, 4
      %s28 = sphi 0, %s30
      %s31 = sphi 0, %s28
      %s32 = sphi 0, %s31
      %s48 = sphi 0, %s32
      %s52 = sphi 0, %s52
      %s54 = sphi 0, %s52
      %s55 = sphi 0, %s54
      %s69 = sphi 0, %s55
      %s73 = sphi 0, %s73
      %s75 = sphi 0, %s73
      %s76 = sphi 0, %s75
      %s90 = sphi 0, %s76
      %s94 = sphi 0, %s94
      %s96 = sphi 0, %s94
      %s97 = sphi 0, %s96
      %s111 = sphi 0, %s97
      %s115 = sphi 0, %s115
      %s117 = sphi 0, %s115
      %s118 = sphi 0, %s117
      %s132 = sphi 0, %s118
      %s136 = sphi 0, %s136
      %s138 = sphi 0, %s136
      %s139 = sphi 0, %s138
      %s153 = sphi 0, %s139
      %s157 = sphi 0, %s157
      %s159 = sphi 0, %s157
      %s160 = sphi 0, %s159
      %s174 = sphi 0, %s160
      %s180 = sphi 0, %s182
      %s183 = sphi 0, %s180
      %s184 = sphi 0, %s183
      %s200 = sphi 0, %s184
    $region4: #{tpu_custom_call.1} parent=1 // loop_header_branch
      %21 = sbr.rel (%p19) target = $region8
    $region5: #{tpu_custom_call.1} parent=1 // loop_body
      %s23 = ssub.s32 %s18, 1
      %s24 = ssub.s32 %s18, 2
      %s25 = sadd.s32 %s18, 1
      %s26 = ssub.s32 %s18, %s25
      %p27 = scmp.eq.s32.totalorder %s26, 0
      %s29 = sadd.s32 %s28, 1
      %s30 = scalar_select %p27, %s28, %s29
      %p33 = pneg %p27
      %p34 = scmp.eq.s32.totalorder %s18, 1
      %p35 = por %p33, %p34
      %p36 = scmp.ne.s32.totalorder %s28, %s31
      %p37 = scmp.eq.s32.totalorder %s18, 0
      %p38 = por %p36, %p37
      %p39 = scmp.ne.s32.totalorder %s28, %s31
      %p40 = scmp.eq.s32.totalorder %s23, 1
      %p41 = por %p39, %p40
      %p42 = scmp.ne.s32.totalorder %s31, %s32
      %p43 = scmp.eq.s32.totalorder %s23, 0
      %p44 = por %p42, %p43
      %p45 = scmp.ne.s32.totalorder %s31, %s32
      %p46 = scmp.eq.s32.totalorder %s24, 1
      %p47 = por %p45, %p46
      %p49 = scmp.ne.s32.totalorder %s32, %s48
      %p50 = scmp.eq.s32.totalorder %s24, 0
      %p51 = por %p49, %p50
      %s53 = sadd.s32 %s52, 1
      %p56 = scmp.eq.s32.totalorder %s18, 1
      %p57 = scmp.ne.s32.totalorder %s52, %s54
      %p58 = scmp.eq.s32.totalorder %s18, 0
      %p59 = por %p57, %p58
      %p60 = scmp.ne.s32.totalorder %s52, %s54
      %p61 = scmp.eq.s32.totalorder %s23, 1
      %p62 = por %p60, %p61
      %p63 = scmp.ne.s32.totalorder %s54, %s55
      %p64 = scmp.eq.s32.totalorder %s23, 0
      %p65 = por %p63, %p64
      %p66 = scmp.ne.s32.totalorder %s54, %s55
      %p67 = scmp.eq.s32.totalorder %s24, 1
      %p68 = por %p66, %p67
      %p70 = scmp.ne.s32.totalorder %s55, %s69
      %p71 = scmp.eq.s32.totalorder %s24, 0
      %p72 = por %p70, %p71
      %s74 = sadd.s32 %s73, 1
      %p77 = scmp.eq.s32.totalorder %s18, 1
      %p78 = scmp.ne.s32.totalorder %s73, %s75
      %p79 = scmp.eq.s32.totalorder %s18, 0
      %p80 = por %p78, %p79
      %p81 = scmp.ne.s32.totalorder %s73, %s75
      %p82 = scmp.eq.s32.totalorder %s23, 1
      %p83 = por %p81, %p82
      %p84 = scmp.ne.s32.totalorder %s75, %s76
      %p85 = scmp.eq.s32.totalorder %s23, 0
      %p86 = por %p84, %p85
      %p87 = scmp.ne.s32.totalorder %s75, %s76
      %p88 = scmp.eq.s32.totalorder %s24, 1
      %p89 = por %p87, %p88
      %p91 = scmp.ne.s32.totalorder %s76, %s90
      %p92 = scmp.eq.s32.totalorder %s24, 0
      %p93 = por %p91, %p92
      %s95 = sadd.s32 %s94, 1
      %p98 = scmp.eq.s32.totalorder %s18, 1
      %p99 = scmp.ne.s32.totalorder %s94, %s96
      %p100 = scmp.eq.s32.totalorder %s18, 0
      %p101 = por %p99, %p100
      %p102 = scmp.ne.s32.totalorder %s94, %s96
      %p103 = scmp.eq.s32.totalorder %s23, 1
      %p104 = por %p102, %p103
      %p105 = scmp.ne.s32.totalorder %s96, %s97
      %p106 = scmp.eq.s32.totalorder %s23, 0
      %p107 = por %p105, %p106
      %p108 = scmp.ne.s32.totalorder %s96, %s97
      %p109 = scmp.eq.s32.totalorder %s24, 1
      %p110 = por %p108, %p109
      %p112 = scmp.ne.s32.totalorder %s97, %s111
      %p113 = scmp.eq.s32.totalorder %s24, 0
      %p114 = por %p112, %p113
      %s116 = sadd.s32 %s115, 1
      %p119 = scmp.eq.s32.totalorder %s18, 1
      %p120 = scmp.ne.s32.totalorder %s115, %s117
      %p121 = scmp.eq.s32.totalorder %s18, 0
      %p122 = por %p120, %p121
      %p123 = scmp.ne.s32.totalorder %s115, %s117
      %p124 = scmp.eq.s32.totalorder %s23, 1
      %p125 = por %p123, %p124
      %p126 = scmp.ne.s32.totalorder %s117, %s118
      %p127 = scmp.eq.s32.totalorder %s23, 0
      %p128 = por %p126, %p127
      %p129 = scmp.ne.s32.totalorder %s117, %s118
      %p130 = scmp.eq.s32.totalorder %s24, 1
      %p131 = por %p129, %p130
      %p133 = scmp.ne.s32.totalorder %s118, %s132
      %p134 = scmp.eq.s32.totalorder %s24, 0
      %p135 = por %p133, %p134
      %s137 = sadd.s32 %s136, 1
      %p140 = scmp.eq.s32.totalorder %s18, 1
      %p141 = scmp.ne.s32.totalorder %s136, %s138
      %p142 = scmp.eq.s32.totalorder %s18, 0
      %p143 = por %p141, %p142
      %p144 = scmp.ne.s32.totalorder %s136, %s138
      %p145 = scmp.eq.s32.totalorder %s23, 1
      %p146 = por %p144, %p145
      %p147 = scmp.ne.s32.totalorder %s138, %s139
      %p148 = scmp.eq.s32.totalorder %s23, 0
      %p149 = por %p147, %p148
      %p150 = scmp.ne.s32.totalorder %s138, %s139
      %p151 = scmp.eq.s32.totalorder %s24, 1
      %p152 = por %p150, %p151
      %p154 = scmp.ne.s32.totalorder %s139, %s153
      %p155 = scmp.eq.s32.totalorder %s24, 0
      %p156 = por %p154, %p155
      %s158 = sadd.s32 %s157, 1
      %p161 = scmp.eq.s32.totalorder %s18, 1
      %p162 = scmp.ne.s32.totalorder %s157, %s159
      %p163 = scmp.eq.s32.totalorder %s18, 0
      %p164 = por %p162, %p163
      %p165 = scmp.ne.s32.totalorder %s157, %s159
      %p166 = scmp.eq.s32.totalorder %s23, 1
      %p167 = por %p165, %p166
      %p168 = scmp.ne.s32.totalorder %s159, %s160
      %p169 = scmp.eq.s32.totalorder %s23, 0
      %p170 = por %p168, %p169
      %p171 = scmp.ne.s32.totalorder %s159, %s160
      %p172 = scmp.eq.s32.totalorder %s24, 1
      %p173 = por %p171, %p172
      %p175 = scmp.ne.s32.totalorder %s160, %s174
      %p176 = scmp.eq.s32.totalorder %s24, 0
      %p177 = por %p175, %p176
      %s178 = ssub.s32 %s18, %s25
      %p179 = scmp.eq.s32.totalorder %s178, 0
      %s181 = sadd.s32 %s180, 1
      %s182 = scalar_select %p179, %s180, %s181
      %p185 = pneg %p179
      %p186 = scmp.eq.s32.totalorder %s18, 1
      %p187 = por %p185, %p186
      %p188 = scmp.ne.s32.totalorder %s180, %s183
      %p189 = scmp.eq.s32.totalorder %s18, 0
      %p190 = por %p188, %p189
      %p191 = scmp.ne.s32.totalorder %s180, %s183
      %p192 = scmp.eq.s32.totalorder %s23, 1
      %p193 = por %p191, %p192
      %p194 = scmp.ne.s32.totalorder %s183, %s184
      %p195 = scmp.eq.s32.totalorder %s23, 0
      %p196 = por %p194, %p195
      %p197 = scmp.ne.s32.totalorder %s183, %s184
      %p198 = scmp.eq.s32.totalorder %s24, 1
      %p199 = por %p197, %p198
      %p201 = scmp.ne.s32.totalorder %s184, %s200
      %p202 = scmp.eq.s32.totalorder %s24, 0
      %p203 = por %p201, %p202
      %p204 = scmp.le.s32.totalorder 1, %s18
      %p205 = scmp.lt.s32.totalorder %s18, 3
      %p206 = pnand %p204, %p205
      %p207 = pneg %p206
      // Predicated region
      $region9: #{tpu_custom_call.1} parent=5 // pred_check
        _
      $region10: #{tpu_custom_call.1} parent=5 // pred_check_branch
        %209 = sbr.rel (%p206) target = $region12
      $region11: #{tpu_custom_call.1} parent=5 // pred_region
        %s210 = ssub.s32 %s18, 1
        // Predicated region
        $region13: #{tpu_custom_call.1} parent=11 // pred_check
          %p211 = pneg %p65
        $region14: #{tpu_custom_call.1} parent=11 // pred_check_branch
          %213 = sbr.rel (%p211) target = $region16
        $region15: #{tpu_custom_call.1} parent=11 // pred_region
          _
        $region16: #{tpu_custom_call.1} parent=11 // pred_fallthru
          _
        // Predicated region
        $region17: #{tpu_custom_call.1} parent=11 // pred_check
          %p214 = pneg %p86
        $region18: #{tpu_custom_call.1} parent=11 // pred_check_branch
          %216 = sbr.rel (%p214) target = $region20
        $region19: #{tpu_custom_call.1} parent=11 // pred_region
          _
        $region20: #{tpu_custom_call.1} parent=11 // pred_fallthru
          _
        // Predicated region
        $region21: #{tpu_custom_call.1} parent=11 // pred_check
          %p217 = pneg %p107
        $region22: #{tpu_custom_call.1} parent=11 // pred_check_branch
          %219 = sbr.rel (%p217) target = $region24
        $region23: #{tpu_custom_call.1} parent=11 // pred_region
          %s221 = ssub.s32 2048, 2048
          %222 = vsyncadd [#allocation3], %s221
          %s223 = sshll.u32 [#allocation2], 4
          %s224 = int_to_ptr.vmem [resolvable:$true] %s223
          %229 = dma.hbm_to_vmem [thread:$0]  %s3, 2048, %s224, [#allocation3], 128, 128, 8
        $region24: #{tpu_custom_call.1} parent=11 // pred_fallthru
          _
        // Predicated region
        $region25: #{tpu_custom_call.1} parent=11 // pred_check
          %p230 = pneg %p128
        $region26: #{tpu_custom_call.1} parent=11 // pred_check_branch
          %232 = sbr.rel (%p230) target = $region28
        $region27: #{tpu_custom_call.1} parent=11 // pred_region
          _
        $region28: #{tpu_custom_call.1} parent=11 // pred_fallthru
          _
        // Predicated region
        $region29: #{tpu_custom_call.1} parent=11 // pred_check
          %p233 = pneg %p149
        $region30: #{tpu_custom_call.1} parent=11 // pred_check_branch
          %235 = sbr.rel (%p233) target = $region32
        $region31: #{tpu_custom_call.1} parent=11 // pred_region
          %s237 = ssub.s32 2048, 2048
          %238 = vsyncadd [#allocation6], %s237
          %s239 = sshll.u32 [#allocation5], 4
          %s240 = int_to_ptr.vmem [resolvable:$true] %s239
          %245 = dma.hbm_to_vmem [thread:$0]  %s5, 2048, %s240, [#allocation6], 128, 128, 8
        $region32: #{tpu_custom_call.1} parent=11 // pred_fallthru
          _
        // Predicated region
        $region33: #{tpu_custom_call.1} parent=11 // pred_check
          %p246 = pneg %p170
        $region34: #{tpu_custom_call.1} parent=11 // pred_check_branch
          %248 = sbr.rel (%p246) target = $region36
        $region35: #{tpu_custom_call.1} parent=11 // pred_region
          _
        $region36: #{tpu_custom_call.1} parent=11 // pred_fallthru
          _
      $region12: #{tpu_custom_call.1} parent=5 // pred_fallthru
        _
      %p249 = scmp.lt.s32.totalorder %s18, 2
      // Predicated region
      $region37: #{tpu_custom_call.1} parent=5 // pred_check
        %p250 = pneg %p249
      $region38: #{tpu_custom_call.1} parent=5 // pred_check_branch
        %252 = sbr.rel (%p250) target = $region40
      $region39: #{tpu_custom_call.1} parent=5 // pred_region
        // Predicated region
        $region41: #{tpu_custom_call.1} parent=39 // pred_check
          %p253 = pneg %p38
        $region42: #{tpu_custom_call.1} parent=39 // pred_check_branch
          %255 = sbr.rel (%p253) target = $region44
        $region43: #{tpu_custom_call.1} parent=39 // pred_region
          %p256 = scmp.lt.s32.totalorder %s18, 1
          %s257 = scalar_select %p256, %s18, 1
          %s258 = smul.addr %s257, 8
          %s259 = scalar_lea.vmem %s0, %s258
        $region44: #{tpu_custom_call.1} parent=39 // pred_fallthru
          _
      $region40: #{tpu_custom_call.1} parent=5 // pred_fallthru
        _
      %p260 = scmp.le.s32.totalorder 1, %s18
      %p261 = scmp.lt.s32.totalorder %s18, 3
      %p262 = pnand %p260, %p261
      %p263 = pneg %p262
      // Predicated region
      $region45: #{tpu_custom_call.1} parent=5 // pred_check
        _
      $region46: #{tpu_custom_call.1} parent=5 // pred_check_branch
        %265 = sbr.rel (%p262) target = $region48
      $region47: #{tpu_custom_call.1} parent=5 // pred_region
        %s266 = ssub.s32 %s18, 1
        // Predicated region
        $region49: #{tpu_custom_call.1} parent=47 // pred_check
          %p267 = pneg %p107
        $region50: #{tpu_custom_call.1} parent=47 // pred_check_branch
          %269 = sbr.rel (%p267) target = $region52
        $region51: #{tpu_custom_call.1} parent=47 // pred_region
          %270 = dma.done [#allocation3], 2048
        $region52: #{tpu_custom_call.1} parent=47 // pred_fallthru
          _
        // Predicated region
        $region53: #{tpu_custom_call.1} parent=47 // pred_check
          %p271 = pneg %p149
        $region54: #{tpu_custom_call.1} parent=47 // pred_check_branch
          %273 = sbr.rel (%p271) target = $region56
        $region55: #{tpu_custom_call.1} parent=47 // pred_region
          %274 = dma.done [#allocation6], 2048
        $region56: #{tpu_custom_call.1} parent=47 // pred_fallthru
          _
        %p275 = scmp.lt.s32.totalorder %s23, 1
        %s276 = scalar_select %p275, %s23, 1
        %s277 = smul.addr %s276, 8
        %s278 = scalar_lea.vmem %s0, %s277
        %p279 = pneg %p44
        %p280 = pneg %p41
        %p281 = pneg %p65
        %p282 = pneg %p62
        %p283 = pneg %p86
        %p284 = pneg %p83
        %p285 = pneg %p107
        %p286 = pneg %p104
        %p287 = pneg %p128
        %p288 = pneg %p125
        %p289 = pneg %p149
        %p290 = pneg %p146
        %p291 = pneg %p170
        %p292 = pneg %p167
        %p293 = pneg %p196
        %p294 = pneg %p193
        %s295 = sand.u32 %s183, 1
        %s296 = scalar_lea.sflag [#allocation4], %s295
        %s297 = sand.u32 %s183, 1
        %s298 = smul.addr %s297, 8
        %s299 = scalar_lea.vmem [#allocation7], %s298
        %p300 = scmp.lt.s32.totalorder %s23, 1
        %s301 = scalar_select %p300, %s23, 1
        %s302 = smul.addr %s301, 8
        %s303 = scalar_lea.vmem %s0, %s302
        %v304 = vld [vmem:[%s303] sm:$0xff]
        %v305 = vld [vmem:[%s1] sm:$0xff]
        %v306 = vld [vmem:[%s2] sm:$0x1]
        %v308 = vlaneseq
        %v309 = vshrl.u32 %v308, 7
        %v310 = vsub.s32 0, %v309
        %v311 = vrot.slane %v306, %v310
        %vm313 = vcmask 64512
        %v315 = vsel %vm313, %v304, 0
        %317 = vmatprep.subr.mxu0 0.0
        %318 = vmatpush1.msra.mxu0 %v305
        %319 = vmatprep.subr.mxu0 0.0
        %320 = vmatpush1.msra.mxu0 0.0
        %321 = vmatprep.subr.mxu0 0.0
        %322 = vmatpush1.msra.mxu0 0.0
        %323 = vmatprep.subr.mxu0 0.0
        %324 = vmatpush1.msra.mxu0 0.0
        %325 = vmatprep.subr.mxu0 0.0
        %326 = vmatpush1.msra.mxu0 0.0
        %327 = vmatprep.subr.mxu0 0.0
        %328 = vmatpush1.msra.mxu0 0.0
        %329 = vmatprep.subr.mxu0 0.0
        %330 = vmatpush1.msra.mxu0 0.0
        %331 = vmatprep.subr.mxu0 0.0
        %332 = vmatpush1.msra.mxu0 0.0
        %333 = vmatprep.subr.mxu0 0.0
        %334 = vmatpush1.msra.mxu0 0.0
        %335 = vmatprep.subr.mxu0 0.0
        %336 = vmatpush1.msra.mxu0 0.0
        %337 = vmatprep.subr.mxu0 0.0
        %338 = vmatpush1.msra.mxu0 0.0
        %339 = vmatprep.subr.mxu0 0.0
        %340 = vmatpush1.msra.mxu0 0.0
        %341 = vmatprep.subr.mxu0 0.0
        %342 = vmatpush1.msra.mxu0 0.0
        %343 = vmatprep.subr.mxu0 0.0
        %344 = vmatpush1.msra.mxu0 0.0
        %345 = vmatprep.subr.mxu0 0.0
        %346 = vmatpush1.msra.mxu0 0.0
        %347 = vmatprep.subr.mxu0 0.0
        %348 = vmatpush1.msra.mxu0 0.0
        %349 = vmatprep.subr.mxu0 0.0
        %350 = vmatpush1.msra.mxu0 0.0
        %351 = vmatprep.subr.mxu0 0.0
        %352 = vmatpush1.msra.mxu0 0.0
        %353 = vmatprep.subr.mxu0 0.0
        %354 = vmatpush1.msra.mxu0 0.0
        %355 = vmatprep.subr.mxu0 0.0
        %356 = vmatpush1.msra.mxu0 0.0
        %357 = vmatprep.subr.mxu0 0.0
        %358 = vmatpush1.msra.mxu0 0.0
        %359 = vmatprep.subr.mxu0 0.0
        %360 = vmatpush1.msra.mxu0 0.0
        %361 = vmatprep.subr.mxu0 0.0
        %362 = vmatpush1.msra.mxu0 0.0
        %363 = vmatprep.subr.mxu0 0.0
        %364 = vmatpush1.msra.mxu0 0.0
        %365 = vmatprep.subr.mxu0 0.0
        %366 = vmatpush1.msra.mxu0 0.0
        %367 = vmatprep.subr.mxu0 0.0
        %368 = vmatpush1.msra.mxu0 0.0
        %369 = vmatprep.subr.mxu0 0.0
        %370 = vmatpush1.msra.mxu0 0.0
        %371 = vmatprep.subr.mxu0 0.0
        %372 = vmatpush1.msra.mxu0 0.0
        %373 = vmatprep.subr.mxu0 0.0
        %374 = vmatpush1.msra.mxu0 0.0
        %375 = vmatprep.subr.mxu0 0.0
        %376 = vmatpush1.msra.mxu0 0.0
        %377 = vmatprep.subr.mxu0 0.0
        %378 = vmatpush1.msra.mxu0 0.0
        %379 = vmatprep.subr.mxu0 0.0
        %380 = vmatpush1.msra.mxu0 0.0
        %381 = vmatprep.mubr.f32.mxu0 0.0
        %382 = vmatmul.mubr.f32.gmra.mrb[0].mxu0 %v315
        %v383 = vpop.f32.mrb[0].mxu0
        %v384 = vadd.f32 %v311, %v383
        %v385 = vpop.f32.mrb[0].mxu0
        %386 = vdwg.mxu0
        %v387 = vmax.f32 %v384, 0.0
        %v388 = vld [vmem:[#allocation2] sm:$0xff]
        %v389 = vld [vmem:[#allocation2 + $0x8] sm:$0xff]
        %v390 = vld [vmem:[#allocation2 + $0x10] sm:$0xff]
        %v391 = vld [vmem:[#allocation2 + $0x18] sm:$0xff]
        %v392 = vld [vmem:[#allocation2 + $0x20] sm:$0xff]
        %v393 = vld [vmem:[#allocation2 + $0x28] sm:$0xff]
        %v394 = vld [vmem:[#allocation2 + $0x30] sm:$0xff]
        %v395 = vld [vmem:[#allocation2 + $0x38] sm:$0xff]
        %v396 = vld [vmem:[#allocation2 + $0x40] sm:$0xff]
        %v397 = vld [vmem:[#allocation2 + $0x48] sm:$0xff]
        %v398 = vld [vmem:[#allocation2 + $0x50] sm:$0xff]
        %v399 = vld [vmem:[#allocation2 + $0x58] sm:$0xff]
        %v400 = vld [vmem:[#allocation2 + $0x60] sm:$0xff]
        %v401 = vld [vmem:[#allocation2 + $0x68] sm:$0xff]
        %v402 = vld [vmem:[#allocation2 + $0x70] sm:$0xff]
        %v403 = vld [vmem:[#allocation2 + $0x78] sm:$0xff]
        %v404 = vld [vmem:[%s4] sm:$0x1]
        %v406 = vlaneseq
        %v407 = vshrl.u32 %v406, 7
        %v408 = vsub.s32 0, %v407
        %v409 = vrot.slane %v404, %v408
        %411 = vmatprep.subr.mxu0 0.0
        %412 = vmatpush1.msra.mxu0 %v388
        %413 = vmatprep.subr.mxu0 0.0
        %414 = vmatpush1.msra.mxu0 %v389
        %415 = vmatprep.subr.mxu0 0.0
        %416 = vmatpush1.msra.mxu0 %v390
        %417 = vmatprep.subr.mxu0 0.0
        %418 = vmatpush1.msra.mxu0 %v391
        %419 = vmatprep.subr.mxu0 0.0
        %420 = vmatpush1.msra.mxu0 %v392
        %421 = vmatprep.subr.mxu0 0.0
        %422 = vmatpush1.msra.mxu0 %v393
        %423 = vmatprep.subr.mxu0 0.0
        %424 = vmatpush1.msra.mxu0 %v394
        %425 = vmatprep.subr.mxu0 0.0
        %426 = vmatpush1.msra.mxu0 %v395
        %427 = vmatprep.subr.mxu0 0.0
        %428 = vmatpush1.msra.mxu0 %v396
        %429 = vmatprep.subr.mxu0 0.0
        %430 = vmatpush1.msra.mxu0 %v397
        %431 = vmatprep.subr.mxu0 0.0
        %432 = vmatpush1.msra.mxu0 %v398
        %433 = vmatprep.subr.mxu0 0.0
        %434 = vmatpush1.msra.mxu0 %v399
        %435 = vmatprep.subr.mxu0 0.0
        %436 = vmatpush1.msra.mxu0 %v400
        %437 = vmatprep.subr.mxu0 0.0
        %438 = vmatpush1.msra.mxu0 %v401
        %439 = vmatprep.subr.mxu0 0.0
        %440 = vmatpush1.msra.mxu0 %v402
        %441 = vmatprep.subr.mxu0 0.0
        %442 = vmatpush1.msra.mxu0 %v403
        %443 = vmatprep.subr.mxu0 0.0
        %444 = vmatpush1.msra.mxu0 0.0
        %445 = vmatprep.subr.mxu0 0.0
        %446 = vmatpush1.msra.mxu0 0.0
        %447 = vmatprep.subr.mxu0 0.0
        %448 = vmatpush1.msra.mxu0 0.0
        %449 = vmatprep.subr.mxu0 0.0
        %450 = vmatpush1.msra.mxu0 0.0
        %451 = vmatprep.subr.mxu0 0.0
        %452 = vmatpush1.msra.mxu0 0.0
        %453 = vmatprep.subr.mxu0 0.0
        %454 = vmatpush1.msra.mxu0 0.0
        %455 = vmatprep.subr.mxu0 0.0
        %456 = vmatpush1.msra.mxu0 0.0
        %457 = vmatprep.subr.mxu0 0.0
        %458 = vmatpush1.msra.mxu0 0.0
        %459 = vmatprep.subr.mxu0 0.0
        %460 = vmatpush1.msra.mxu0 0.0
        %461 = vmatprep.subr.mxu0 0.0
        %462 = vmatpush1.msra.mxu0 0.0
        %463 = vmatprep.subr.mxu0 0.0
        %464 = vmatpush1.msra.mxu0 0.0
        %465 = vmatprep.subr.mxu0 0.0
        %466 = vmatpush1.msra.mxu0 0.0
        %467 = vmatprep.subr.mxu0 0.0
        %468 = vmatpush1.msra.mxu0 0.0
        %469 = vmatprep.subr.mxu0 0.0
        %470 = vmatpush1.msra.mxu0 0.0
        %471 = vmatprep.subr.mxu0 0.0
        %472 = vmatpush1.msra.mxu0 0.0
        %473 = vmatprep.subr.mxu0 0.0
        %474 = vmatpush1.msra.mxu0 0.0
        %475 = vmatprep.mubr.f32.mxu0 0.0
        %476 = vmatmul.mubr.f32.gmra.mrb[0].mxu0 %v387
        %v477 = vpop.f32.mrb[0].mxu0
        %v478 = vadd.f32 %v409, %v477
        %v479 = vpop.f32.mrb[0].mxu0
        %480 = vdwg.mxu0
        %v481 = vmax.f32 %v478, 0.0
        %v482 = vld [vmem:[#allocation5] sm:$0xff]
        %v483 = vld [vmem:[#allocation5 + $0x8] sm:$0xff]
        %v484 = vld [vmem:[#allocation5 + $0x10] sm:$0xff]
        %v485 = vld [vmem:[#allocation5 + $0x18] sm:$0xff]
        %v486 = vld [vmem:[#allocation5 + $0x20] sm:$0xff]
        %v487 = vld [vmem:[#allocation5 + $0x28] sm:$0xff]
        %v488 = vld [vmem:[#allocation5 + $0x30] sm:$0xff]
        %v489 = vld [vmem:[#allocation5 + $0x38] sm:$0xff]
        %v490 = vld [vmem:[#allocation5 + $0x40] sm:$0xff]
        %v491 = vld [vmem:[#allocation5 + $0x48] sm:$0xff]
        %v492 = vld [vmem:[#allocation5 + $0x50] sm:$0xff]
        %v493 = vld [vmem:[#allocation5 + $0x58] sm:$0xff]
        %v494 = vld [vmem:[#allocation5 + $0x60] sm:$0xff]
        %v495 = vld [vmem:[#allocation5 + $0x68] sm:$0xff]
        %v496 = vld [vmem:[#allocation5 + $0x70] sm:$0xff]
        %v497 = vld [vmem:[#allocation5 + $0x78] sm:$0xff]
        %v498 = vld [vmem:[%s6] sm:$0x1]
        %v500 = vlaneseq
        %v501 = vshrl.u32 %v500, 7
        %v502 = vsub.s32 0, %v501
        %v503 = vrot.slane %v498, %v502
        %505 = vmatprep.subr.mxu0 0.0
        %506 = vmatpush1.msra.mxu0 %v482
        %507 = vmatprep.subr.mxu0 0.0
        %508 = vmatpush1.msra.mxu0 %v483
        %509 = vmatprep.subr.mxu0 0.0
        %510 = vmatpush1.msra.mxu0 %v484
        %511 = vmatprep.subr.mxu0 0.0
        %512 = vmatpush1.msra.mxu0 %v485
        %513 = vmatprep.subr.mxu0 0.0
        %514 = vmatpush1.msra.mxu0 %v486
        %515 = vmatprep.subr.mxu0 0.0
        %516 = vmatpush1.msra.mxu0 %v487
        %517 = vmatprep.subr.mxu0 0.0
        %518 = vmatpush1.msra.mxu0 %v488
        %519 = vmatprep.subr.mxu0 0.0
        %520 = vmatpush1.msra.mxu0 %v489
        %521 = vmatprep.subr.mxu0 0.0
        %522 = vmatpush1.msra.mxu0 %v490
        %523 = vmatprep.subr.mxu0 0.0
        %524 = vmatpush1.msra.mxu0 %v491
        %525 = vmatprep.subr.mxu0 0.0
        %526 = vmatpush1.msra.mxu0 %v492
        %527 = vmatprep.subr.mxu0 0.0
        %528 = vmatpush1.msra.mxu0 %v493
        %529 = vmatprep.subr.mxu0 0.0
        %530 = vmatpush1.msra.mxu0 %v494
        %531 = vmatprep.subr.mxu0 0.0
        %532 = vmatpush1.msra.mxu0 %v495
        %533 = vmatprep.subr.mxu0 0.0
        %534 = vmatpush1.msra.mxu0 %v496
        %535 = vmatprep.subr.mxu0 0.0
        %536 = vmatpush1.msra.mxu0 %v497
        %537 = vmatprep.subr.mxu0 0.0
        %538 = vmatpush1.msra.mxu0 0.0
        %539 = vmatprep.subr.mxu0 0.0
        %540 = vmatpush1.msra.mxu0 0.0
        %541 = vmatprep.subr.mxu0 0.0
        %542 = vmatpush1.msra.mxu0 0.0
        %543 = vmatprep.subr.mxu0 0.0
        %544 = vmatpush1.msra.mxu0 0.0
        %545 = vmatprep.subr.mxu0 0.0
        %546 = vmatpush1.msra.mxu0 0.0
        %547 = vmatprep.subr.mxu0 0.0
        %548 = vmatpush1.msra.mxu0 0.0
        %549 = vmatprep.subr.mxu0 0.0
        %550 = vmatpush1.msra.mxu0 0.0
        %551 = vmatprep.subr.mxu0 0.0
        %552 = vmatpush1.msra.mxu0 0.0
        %553 = vmatprep.subr.mxu0 0.0
        %554 = vmatpush1.msra.mxu0 0.0
        %555 = vmatprep.subr.mxu0 0.0
        %556 = vmatpush1.msra.mxu0 0.0
        %557 = vmatprep.subr.mxu0 0.0
        %558 = vmatpush1.msra.mxu0 0.0
        %559 = vmatprep.subr.mxu0 0.0
        %560 = vmatpush1.msra.mxu0 0.0
        %561 = vmatprep.subr.mxu0 0.0
        %562 = vmatpush1.msra.mxu0 0.0
        %563 = vmatprep.subr.mxu0 0.0
        %564 = vmatpush1.msra.mxu0 0.0
        %565 = vmatprep.subr.mxu0 0.0
        %566 = vmatpush1.msra.mxu0 0.0
        %567 = vmatprep.subr.mxu0 0.0
        %568 = vmatpush1.msra.mxu0 0.0
        %569 = vmatprep.mubr.f32.mxu0 0.0
        %570 = vmatmul.mubr.f32.gmra.mrb[0].mxu0 %v481
        %v571 = vpop.f32.mrb[0].mxu0
        %v572 = vadd.f32 %v503, %v571
        %v573 = vpop.f32.mrb[0].mxu0
        %574 = vdwg.mxu0
        %575 = vst [vmem:[%s299] sm:$0xff] %v572
        %s576 = sand.u32 %s183, 1
        %s577 = scalar_lea.sflag [#allocation4], %s576
        %s578 = sand.u32 %s183, 1
        %s579 = smul.addr %s578, 8
        %s580 = scalar_lea.vmem [#allocation7], %s579
        // Predicated region
        $region57: #{tpu_custom_call.1} parent=47 // pred_check
          %p581 = pneg %p193
        $region58: #{tpu_custom_call.1} parent=47 // pred_check_branch
          %583 = sbr.rel (%p581) target = $region60
        $region59: #{tpu_custom_call.1} parent=47 // pred_region
          %s585 = ssub.s32 128, 128
          %586 = vsyncadd %s577, %s585
          %s587 = smul.addr %s23, 128
          %s588 = scalar_lea.hbm %s7, %s587
          %s590 = sshll.u32 %s580, 4
          %s591 = int_to_ptr.vmem [resolvable:$true] %s590
          %593 = dma.vmem_to_hbm [thread:$0]  %s591, 128, %s588, %s577
        $region60: #{tpu_custom_call.1} parent=47 // pred_fallthru
          _
      $region48: #{tpu_custom_call.1} parent=5 // pred_fallthru
        _
      %p594 = scmp.le.s32.totalorder 2, %s18
      // Predicated region
      $region61: #{tpu_custom_call.1} parent=5 // pred_check
        %p595 = pneg %p594
      $region62: #{tpu_custom_call.1} parent=5 // pred_check_branch
        %597 = sbr.rel (%p595) target = $region64
      $region63: #{tpu_custom_call.1} parent=5 // pred_region
        %s598 = ssub.s32 %s18, 2
        // Predicated region
        $region65: #{tpu_custom_call.1} parent=63 // pred_check
          %p599 = pneg %p199
        $region66: #{tpu_custom_call.1} parent=63 // pred_check_branch
          %601 = sbr.rel (%p599) target = $region68
        $region67: #{tpu_custom_call.1} parent=63 // pred_region
          %s602 = sand.u32 %s184, 1
          %s603 = scalar_lea.sflag [#allocation4], %s602
          %s604 = sand.u32 %s184, 1
          %s605 = smul.addr %s604, 8
          %s606 = scalar_lea.vmem [#allocation7], %s605
          %607 = dma.done %s603, 128
        $region68: #{tpu_custom_call.1} parent=63 // pred_fallthru
          _
      $region64: #{tpu_custom_call.1} parent=5 // pred_fallthru
        _
    $region6: #{tpu_custom_call.1} parent=1 // loop_footer
      %s22 = sadd.s32 1, %s18
    $region7: #{tpu_custom_call.1} parent=1 // loop_footer_branch
      %17 = sbr.rel target = $region3
    $region8: #{tpu_custom_call.1} parent=1 // loop_exit
      _
    %608 = vsyncpa [#allocation3], 1
    %s609 = scalar_lea.sflag [#allocation3], 1
    %610 = vsyncpa %s609, 1
    %611 = vsyncpa [#allocation6], 1
    %612 = vsyncpa [#allocation4], 1
    %s613 = scalar_lea.sflag [#allocation4], 1
    %614 = vsyncpa %s613, 1

// kernel: tpu_custom_call.1
$region0: #{tpu_custom_call.1}
  #allocation0 [shape = 'u32[]', space=smem, size = 0x4, offset = 0x4, fixed_abs, tag = 'smem constant byte address 0x4 - core index']
  #allocation1 [shape = 'u32[144,128]{1,0:T(1,128)}', space=vmem, size = 0x12000, scoped, tag = 'internal scratch']
  %s0 = inlined_call_operand.vmem [shape: f32[16,8], index: 0, kind: input, shape index: {}]
  %s1 = inlined_call_operand.vmem [shape: f32[8,128], index: 1, kind: input, shape index: {}]
  %s2 = inlined_call_operand.vmem [shape: f32[1,128], index: 2, kind: input, shape index: {}]
  %s3 = inlined_call_operand.hbm [shape: f32[128,128], index: 3, kind: input, shape index: {}]
  %s4 = inlined_call_operand.vmem [shape: f32[1,128], index: 4, kind: input, shape index: {}]
  %s5 = inlined_call_operand.hbm [shape: f32[128,128], index: 5, kind: input, shape index: {}]
  %s6 = inlined_call_operand.vmem [shape: f32[1,128], index: 6, kind: input, shape index: {}]
  %s7 = inlined_call_operand.hbm [shape: f32[16,128], index: 7, kind: output, shape index: {}]
  %s8 = sld [smem:[#allocation0]]
  $region69: #{tpu_custom_call.1} parent=0
    _
  %s10 = ssub.s32 1, %s8
  %s11 = scalar_select 0, %s10, %s8
  $region1: #{tpu_custom_call.1} parent=0
    #allocation2 [shape = 'u8[65536]{0}', space=vmem, size = 0x10000, scoped, tag = 'input window, operand 3, single buffered']
    #allocation3 [shape = 's32[2]{0}', space=sflag, size = 0x8, scoped, tag = 'scoped memory for tpu_custom_call.1']
    #allocation4 [shape = 's32[2]{0}', space=sflag, size = 0x8, scoped, tag = 'scoped memory for tpu_custom_call.1']
    #allocation5 [shape = 'u8[65536]{0}', space=vmem, size = 0x10000, scoped, tag = 'input window, operand 5, single buffered']
    #allocation6 [shape = 's32[1]{0}', space=sflag, size = 0x4, scoped, tag = 'scoped memory for tpu_custom_call.1']
    #allocation7 [shape = 'u8[8192]{0}', space=vmem, size = 0x2000, scoped, tag = 'output window, operand 0']
    %12 = vsyncpa [#allocation3], 0
    %13 = vsyncpa [#allocation6], 0
    %14 = vsyncpa [#allocation4], 0
    %s15 = scalar_lea.sflag [#allocation4], 1
    %16 = vsyncpa %s15, 0
    loop: start=0, step=1, limit=4
    $region2: #{tpu_custom_call.1} parent=1 // loop_pre_header
      _
    $region3: #{tpu_custom_call.1} parent=1 // loop_header
      %s18 = sphi 0, %s22
      %p19 = scmp.ge.s32.totalorder %s18, 4
      %s28 = sphi 0, %s30
      %s31 = sphi 0, %s28
      %s32 = sphi 0, %s31
      %s48 = sphi 0, %s32
      %s52 = sphi 0, %s52
      %s54 = sphi 0, %s52
      %s55 = sphi 0, %s54
      %s69 = sphi 0, %s55
      %s73 = sphi 0, %s73
      %s75 = sphi 0, %s73
      %s76 = sphi 0, %s75
      %s90 = sphi 0, %s76
      %s94 = sphi 0, %s94
      %s96 = sphi 0, %s94
      %s97 = sphi 0, %s96
      %s111 = sphi 0, %s97
      %s115 = sphi 0, %s115
      %s117 = sphi 0, %s115
      %s118 = sphi 0, %s117
      %s132 = sphi 0, %s118
      %s136 = sphi 0, %s136
      %s138 = sphi 0, %s136
      %s139 = sphi 0, %s138
      %s153 = sphi 0, %s139
      %s157 = sphi 0, %s157
      %s159 = sphi 0, %s157
      %s160 = sphi 0, %s159
      %s174 = sphi 0, %s160
      %s180 = sphi 0, %s182
      %s183 = sphi 0, %s180
      %s184 = sphi 0, %s183
      %s200 = sphi 0, %s184
    $region4: #{tpu_custom_call.1} parent=1 // loop_header_branch
      %21 = sbr.rel (%p19) target = $region8
    $region5: #{tpu_custom_call.1} parent=1 // loop_body
      %s23 = ssub.s32 %s18, 1
      %s24 = ssub.s32 %s18, 2
      %s25 = sadd.s32 %s18, 1
      %s26 = ssub.s32 %s18, %s25
      %p27 = scmp.eq.s32.totalorder %s26, 0
      %s29 = sadd.s32 %s28, 1
      %s30 = scalar_select %p27, %s28, %s29
      %p33 = pneg %p27
      %p34 = scmp.eq.s32.totalorder %s18, 1
      %p35 = por %p33, %p34
      %p36 = scmp.ne.s32.totalorder %s28, %s31
      %p37 = scmp.eq.s32.totalorder %s18, 0
      %p38 = por %p36, %p37
      %p39 = scmp.ne.s32.totalorder %s28, %s31
      %p40 = scmp.eq.s32.totalorder %s23, 1
      %p41 = por %p39, %p40
      %p42 = scmp.ne.s32.totalorder %s31, %s32
      %p43 = scmp.eq.s32.totalorder %s23, 0
      %p44 = por %p42, %p43
      %p45 = scmp.ne.s32.totalorder %s31, %s32
      %p46 = scmp.eq.s32.totalorder %s24, 1
      %p47 = por %p45, %p46
      %p49 = scmp.ne.s32.totalorder %s32, %s48
      %p50 = scmp.eq.s32.totalorder %s24, 0
      %p51 = por %p49, %p50
      %s53 = sadd.s32 %s52, 1
      %p56 = scmp.eq.s32.totalorder %s18, 1
      %p57 = scmp.ne.s32.totalorder %s52, %s54
      %p58 = scmp.eq.s32.totalorder %s18, 0
      %p59 = por %p57, %p58
      %p60 = scmp.ne.s32.totalorder %s52, %s54
      %p61 = scmp.eq.s32.totalorder %s23, 1
      %p62 = por %p60, %p61
      %p63 = scmp.ne.s32.totalorder %s54, %s55
      %p64 = scmp.eq.s32.totalorder %s23, 0
      %p65 = por %p63, %p64
      %p66 = scmp.ne.s32.totalorder %s54, %s55
      %p67 = scmp.eq.s32.totalorder %s24, 1
      %p68 = por %p66, %p67
      %p70 = scmp.ne.s32.totalorder %s55, %s69
      %p71 = scmp.eq.s32.totalorder %s24, 0
      %p72 = por %p70, %p71
      %s74 = sadd.s32 %s73, 1
      %p77 = scmp.eq.s32.totalorder %s18, 1
      %p78 = scmp.ne.s32.totalorder %s73, %s75
      %p79 = scmp.eq.s32.totalorder %s18, 0
      %p80 = por %p78, %p79
      %p81 = scmp.ne.s32.totalorder %s73, %s75
      %p82 = scmp.eq.s32.totalorder %s23, 1
      %p83 = por %p81, %p82
      %p84 = scmp.ne.s32.totalorder %s75, %s76
      %p85 = scmp.eq.s32.totalorder %s23, 0
      %p86 = por %p84, %p85
      %p87 = scmp.ne.s32.totalorder %s75, %s76
      %p88 = scmp.eq.s32.totalorder %s24, 1
      %p89 = por %p87, %p88
      %p91 = scmp.ne.s32.totalorder %s76, %s90
      %p92 = scmp.eq.s32.totalorder %s24, 0
      %p93 = por %p91, %p92
      %s95 = sadd.s32 %s94, 1
      %p98 = scmp.eq.s32.totalorder %s18, 1
      %p99 = scmp.ne.s32.totalorder %s94, %s96
      %p100 = scmp.eq.s32.totalorder %s18, 0
      %p101 = por %p99, %p100
      %p102 = scmp.ne.s32.totalorder %s94, %s96
      %p103 = scmp.eq.s32.totalorder %s23, 1
      %p104 = por %p102, %p103
      %p105 = scmp.ne.s32.totalorder %s96, %s97
      %p106 = scmp.eq.s32.totalorder %s23, 0
      %p107 = por %p105, %p106
      %p108 = scmp.ne.s32.totalorder %s96, %s97
      %p109 = scmp.eq.s32.totalorder %s24, 1
      %p110 = por %p108, %p109
      %p112 = scmp.ne.s32.totalorder %s97, %s111
      %p113 = scmp.eq.s32.totalorder %s24, 0
      %p114 = por %p112, %p113
      %s116 = sadd.s32 %s115, 1
      %p119 = scmp.eq.s32.totalorder %s18, 1
      %p120 = scmp.ne.s32.totalorder %s115, %s117
      %p121 = scmp.eq.s32.totalorder %s18, 0
      %p122 = por %p120, %p121
      %p123 = scmp.ne.s32.totalorder %s115, %s117
      %p124 = scmp.eq.s32.totalorder %s23, 1
      %p125 = por %p123, %p124
      %p126 = scmp.ne.s32.totalorder %s117, %s118
      %p127 = scmp.eq.s32.totalorder %s23, 0
      %p128 = por %p126, %p127
      %p129 = scmp.ne.s32.totalorder %s117, %s118
      %p130 = scmp.eq.s32.totalorder %s24, 1
      %p131 = por %p129, %p130
      %p133 = scmp.ne.s32.totalorder %s118, %s132
      %p134 = scmp.eq.s32.totalorder %s24, 0
      %p135 = por %p133, %p134
      %s137 = sadd.s32 %s136, 1
      %p140 = scmp.eq.s32.totalorder %s18, 1
      %p141 = scmp.ne.s32.totalorder %s136, %s138
      %p142 = scmp.eq.s32.totalorder %s18, 0
      %p143 = por %p141, %p142
      %p144 = scmp.ne.s32.totalorder %s136, %s138
      %p145 = scmp.eq.s32.totalorder %s23, 1
      %p146 = por %p144, %p145
      %p147 = scmp.ne.s32.totalorder %s138, %s139
      %p148 = scmp.eq.s32.totalorder %s23, 0
      %p149 = por %p147, %p148
      %p150 = scmp.ne.s32.totalorder %s138, %s139
      %p151 = scmp.eq.s32.totalorder %s24, 1
      %p152 = por %p150, %p151
      %p154 = scmp.ne.s32.totalorder %s139, %s153
      %p155 = scmp.eq.s32.totalorder %s24, 0
      %p156 = por %p154, %p155
      %s158 = sadd.s32 %s157, 1
      %p161 = scmp.eq.s32.totalorder %s18, 1
      %p162 = scmp.ne.s32.totalorder %s157, %s159
      %p163 = scmp.eq.s32.totalorder %s18, 0
      %p164 = por %p162, %p163
      %p165 = scmp.ne.s32.totalorder %s157, %s159
      %p166 = scmp.eq.s32.totalorder %s23, 1
      %p167 = por %p165, %p166
      %p168 = scmp.ne.s32.totalorder %s159, %s160
      %p169 = scmp.eq.s32.totalorder %s23, 0
      %p170 = por %p168, %p169
      %p171 = scmp.ne.s32.totalorder %s159, %s160
      %p172 = scmp.eq.s32.totalorder %s24, 1
      %p173 = por %p171, %p172
      %p175 = scmp.ne.s32.totalorder %s160, %s174
      %p176 = scmp.eq.s32.totalorder %s24, 0
      %p177 = por %p175, %p176
      %s178 = ssub.s32 %s18, %s25
      %p179 = scmp.eq.s32.totalorder %s178, 0
      %s181 = sadd.s32 %s180, 1
      %s182 = scalar_select %p179, %s180, %s181
      %p185 = pneg %p179
      %p186 = scmp.eq.s32.totalorder %s18, 1
      %p187 = por %p185, %p186
      %p188 = scmp.ne.s32.totalorder %s180, %s183
      %p189 = scmp.eq.s32.totalorder %s18, 0
      %p190 = por %p188, %p189
      %p191 = scmp.ne.s32.totalorder %s180, %s183
      %p192 = scmp.eq.s32.totalorder %s23, 1
      %p193 = por %p191, %p192
      %p194 = scmp.ne.s32.totalorder %s183, %s184
      %p195 = scmp.eq.s32.totalorder %s23, 0
      %p196 = por %p194, %p195
      %p197 = scmp.ne.s32.totalorder %s183, %s184
      %p198 = scmp.eq.s32.totalorder %s24, 1
      %p199 = por %p197, %p198
      %p201 = scmp.ne.s32.totalorder %s184, %s200
      %p202 = scmp.eq.s32.totalorder %s24, 0
      %p203 = por %p201, %p202
      %p204 = scmp.le.s32.totalorder 1, %s18
      %p205 = scmp.lt.s32.totalorder %s18, 3
      %p206 = pnand %p204, %p205
      %p207 = pneg %p206
      // Predicated region
      $region9: #{tpu_custom_call.1} parent=5 // pred_check
        _
      $region10: #{tpu_custom_call.1} parent=5 // pred_check_branch
        %209 = sbr.rel (%p206) target = $region12
      $region11: #{tpu_custom_call.1} parent=5 // pred_region
        %s210 = ssub.s32 %s18, 1
        // Predicated region
        $region13: #{tpu_custom_call.1} parent=11 // pred_check
          %p211 = pneg %p65
        $region14: #{tpu_custom_call.1} parent=11 // pred_check_branch
          %213 = sbr.rel (%p211) target = $region16
        $region15: #{tpu_custom_call.1} parent=11 // pred_region
          _
        $region16: #{tpu_custom_call.1} parent=11 // pred_fallthru
          _
        // Predicated region
        $region17: #{tpu_custom_call.1} parent=11 // pred_check
          %p214 = pneg %p86
        $region18: #{tpu_custom_call.1} parent=11 // pred_check_branch
          %216 = sbr.rel (%p214) target = $region20
        $region19: #{tpu_custom_call.1} parent=11 // pred_region
          _
        $region20: #{tpu_custom_call.1} parent=11 // pred_fallthru
          _
        // Predicated region
        $region21: #{tpu_custom_call.1} parent=11 // pred_check
          %p217 = pneg %p107
        $region22: #{tpu_custom_call.1} parent=11 // pred_check_branch
          %219 = sbr.rel (%p217) target = $region24
        $region23: #{tpu_custom_call.1} parent=11 // pred_region
          %s221 = ssub.s32 2048, 2048
          %222 = vsyncadd [#allocation3], %s221
          %s223 = sshll.u32 [#allocation2], 4
          %s224 = int_to_ptr.vmem [resolvable:$true] %s223
          %229 = dma.hbm_to_vmem [thread:$0]  %s3, 2048, %s224, [#allocation3], 128, 128, 8
        $region24: #{tpu_custom_call.1} parent=11 // pred_fallthru
          _
        // Predicated region
        $region25: #{tpu_custom_call.1} parent=11 // pred_check
          %p230 = pneg %p128
        $region26: #{tpu_custom_call.1} parent=11 // pred_check_branch
          %232 = sbr.rel (%p230) target = $region28
        $region27: #{tpu_custom_call.1} parent=11 // pred_region
          _
        $region28: #{tpu_custom_call.1} parent=11 // pred_fallthru
          _
        // Predicated region
        $region29: #{tpu_custom_call.1} parent=11 // pred_check
          %p233 = pneg %p149
        $region30: #{tpu_custom_call.1} parent=11 // pred_check_branch
          %235 = sbr.rel (%p233) target = $region32
        $region31: #{tpu_custom_call.1} parent=11 // pred_region
          %s237 = ssub.s32 2048, 2048
          %238 = vsyncadd [#allocation6], %s237
          %s239 = sshll.u32 [#allocation5], 4
          %s240 = int_to_ptr.vmem [resolvable:$true] %s239
          %245 = dma.hbm_to_vmem [thread:$0]  %s5, 2048, %s240, [#allocation6], 128, 128, 8
        $region32: #{tpu_custom_call.1} parent=11 // pred_fallthru
          _
        // Predicated region
        $region33: #{tpu_custom_call.1} parent=11 // pred_check
          %p246 = pneg %p170
        $region34: #{tpu_custom_call.1} parent=11 // pred_check_branch
          %248 = sbr.rel (%p246) target = $region36
        $region35: #{tpu_custom_call.1} parent=11 // pred_region
          _
        $region36: #{tpu_custom_call.1} parent=11 // pred_fallthru
          _
      $region12: #{tpu_custom_call.1} parent=5 // pred_fallthru
        _
      %p249 = scmp.lt.s32.totalorder %s18, 2
      // Predicated region
      $region37: #{tpu_custom_call.1} parent=5 // pred_check
        %p250 = pneg %p249
      $region38: #{tpu_custom_call.1} parent=5 // pred_check_branch
        %252 = sbr.rel (%p250) target = $region40
      $region39: #{tpu_custom_call.1} parent=5 // pred_region
        // Predicated region
        $region41: #{tpu_custom_call.1} parent=39 // pred_check
          %p253 = pneg %p38
        $region42: #{tpu_custom_call.1} parent=39 // pred_check_branch
          %255 = sbr.rel (%p253) target = $region44
        $region43: #{tpu_custom_call.1} parent=39 // pred_region
          %p256 = scmp.lt.s32.totalorder %s18, 1
          %s257 = scalar_select %p256, %s18, 1
          %s258 = smul.addr %s257, 8
          %s259 = scalar_lea.vmem %s0, %s258
        $region44: #{tpu_custom_call.1} parent=39 // pred_fallthru
          _
      $region40: #{tpu_custom_call.1} parent=5 // pred_fallthru
        _
      %p260 = scmp.le.s32.totalorder 1, %s18
      %p261 = scmp.lt.s32.totalorder %s18, 3
      %p262 = pnand %p260, %p261
      %p263 = pneg %p262
      // Predicated region
      $region45: #{tpu_custom_call.1} parent=5 // pred_check
        _
      $region46: #{tpu_custom_call.1} parent=5 // pred_check_branch
        %265 = sbr.rel (%p262) target = $region48
      $region47: #{tpu_custom_call.1} parent=5 // pred_region
        %s266 = ssub.s32 %s18, 1
        // Predicated region
        $region49: #{tpu_custom_call.1} parent=47 // pred_check
          %p267 = pneg %p107
        $region50: #{tpu_custom_call.1} parent=47 // pred_check_branch
          %269 = sbr.rel (%p267) target = $region52
        $region51: #{tpu_custom_call.1} parent=47 // pred_region
          %270 = dma.done [#allocation3], 2048
        $region52: #{tpu_custom_call.1} parent=47 // pred_fallthru
          _
        // Predicated region
        $region53: #{tpu_custom_call.1} parent=47 // pred_check
          %p271 = pneg %p149
        $region54: #{tpu_custom_call.1} parent=47 // pred_check_branch
          %273 = sbr.rel (%p271) target = $region56
        $region55: #{tpu_custom_call.1} parent=47 // pred_region
          %274 = dma.done [#allocation6], 2048
        $region56: #{tpu_custom_call.1} parent=47 // pred_fallthru
          _
        %p275 = scmp.lt.s32.totalorder %s23, 1
        %s276 = scalar_select %p275, %s23, 1
        %s277 = smul.addr %s276, 8
        %s278 = scalar_lea.vmem %s0, %s277
        %p279 = pneg %p44
        %p280 = pneg %p41
        %p281 = pneg %p65
        %p282 = pneg %p62
        %p283 = pneg %p86
        %p284 = pneg %p83
        %p285 = pneg %p107
        %p286 = pneg %p104
        %p287 = pneg %p128
        %p288 = pneg %p125
        %p289 = pneg %p149
        %p290 = pneg %p146
        %p291 = pneg %p170
        %p292 = pneg %p167
        %p293 = pneg %p196
        %p294 = pneg %p193
        %s295 = sand.u32 %s183, 1
        %s296 = scalar_lea.sflag [#allocation4], %s295
        %s297 = sand.u32 %s183, 1
        %s298 = smul.addr %s297, 8
        %s299 = scalar_lea.vmem [#allocation7], %s298
        %p300 = scmp.lt.s32.totalorder %s23, 1
        %s301 = scalar_select %p300, %s23, 1
        %s302 = smul.addr %s301, 8
        %s303 = scalar_lea.vmem %s0, %s302
        %v304 = vld [vmem:[%s303] sm:$0xff]
        %v305 = vld [vmem:[%s1] sm:$0xff]
        %v306 = vld [vmem:[%s2] sm:$0x1]
        %v308 = vlaneseq
        %v309 = vshrl.u32 %v308, 7
        %v310 = vsub.s32 0, %v309
        %v311 = vrot.slane %v306, %v310
        %vm313 = vcmask 64512
        %v315 = vsel %vm313, %v304, 0
        %317 = vmatprep.subr.mxu0 0.0
        %318 = vmatpush1.msra.mxu0 %v305
        %319 = vmatprep.subr.mxu0 0.0
        %320 = vmatpush1.msra.mxu0 0.0
        %321 = vmatprep.subr.mxu0 0.0
        %322 = vmatpush1.msra.mxu0 0.0
        %323 = vmatprep.subr.mxu0 0.0
        %324 = vmatpush1.msra.mxu0 0.0
        %325 = vmatprep.subr.mxu0 0.0
        %326 = vmatpush1.msra.mxu0 0.0
        %327 = vmatprep.subr.mxu0 0.0
        %328 = vmatpush1.msra.mxu0 0.0
        %329 = vmatprep.subr.mxu0 0.0
        %330 = vmatpush1.msra.mxu0 0.0
        %331 = vmatprep.subr.mxu0 0.0
        %332 = vmatpush1.msra.mxu0 0.0
        %333 = vmatprep.subr.mxu0 0.0
        %334 = vmatpush1.msra.mxu0 0.0
        %335 = vmatprep.subr.mxu0 0.0
        %336 = vmatpush1.msra.mxu0 0.0
        %337 = vmatprep.subr.mxu0 0.0
        %338 = vmatpush1.msra.mxu0 0.0
        %339 = vmatprep.subr.mxu0 0.0
        %340 = vmatpush1.msra.mxu0 0.0
        %341 = vmatprep.subr.mxu0 0.0
        %342 = vmatpush1.msra.mxu0 0.0
        %343 = vmatprep.subr.mxu0 0.0
        %344 = vmatpush1.msra.mxu0 0.0
        %345 = vmatprep.subr.mxu0 0.0
        %346 = vmatpush1.msra.mxu0 0.0
        %347 = vmatprep.subr.mxu0 0.0
        %348 = vmatpush1.msra.mxu0 0.0
        %349 = vmatprep.subr.mxu0 0.0
        %350 = vmatpush1.msra.mxu0 0.0
        %351 = vmatprep.subr.mxu0 0.0
        %352 = vmatpush1.msra.mxu0 0.0
        %353 = vmatprep.subr.mxu0 0.0
        %354 = vmatpush1.msra.mxu0 0.0
        %355 = vmatprep.subr.mxu0 0.0
        %356 = vmatpush1.msra.mxu0 0.0
        %357 = vmatprep.subr.mxu0 0.0
        %358 = vmatpush1.msra.mxu0 0.0
        %359 = vmatprep.subr.mxu0 0.0
        %360 = vmatpush1.msra.mxu0 0.0
        %361 = vmatprep.subr.mxu0 0.0
        %362 = vmatpush1.msra.mxu0 0.0
        %363 = vmatprep.subr.mxu0 0.0
        %364 = vmatpush1.msra.mxu0 0.0
        %365 = vmatprep.subr.mxu0 0.0
        %366 = vmatpush1.msra.mxu0 0.0
        %367 = vmatprep.subr.mxu0 0.0
        %368 = vmatpush1.msra.mxu0 0.0
        %369 = vmatprep.subr.mxu0 0.0
        %370 = vmatpush1.msra.mxu0 0.0
        %371 = vmatprep.subr.mxu0 0.0
        %372 = vmatpush1.msra.mxu0 0.0
        %373 = vmatprep.subr.mxu0 0.0
        %374 = vmatpush1.msra.mxu0 0.0
        %375 = vmatprep.subr.mxu0 0.0
        %376 = vmatpush1.msra.mxu0 0.0
        %377 = vmatprep.subr.mxu0 0.0
        %378 = vmatpush1.msra.mxu0 0.0
        %379 = vmatprep.subr.mxu0 0.0
        %380 = vmatpush1.msra.mxu0 0.0
        %381 = vmatprep.mubr.f32.mxu0 0.0
        %382 = vmatmul.mubr.f32.gmra.mrb[0].mxu0 %v315
        %v383 = vpop.f32.mrb[0].mxu0
        %v384 = vadd.f32 %v311, %v383
        %v385 = vpop.f32.mrb[0].mxu0
        %386 = vdwg.mxu0
        %v387 = vmax.f32 %v384, 0.0
        %v388 = vld [vmem:[#allocation2] sm:$0xff]
        %v389 = vld [vmem:[#allocation2 + $0x8] sm:$0xff]
        %v390 = vld [vmem:[#allocation2 + $0x10] sm:$0xff]
        %v391 = vld [vmem:[#allocation2 + $0x18] sm:$0xff]
        %v392 = vld [vmem:[#allocation2 + $0x20] sm:$0xff]
        %v393 = vld [vmem:[#allocation2 + $0x28] sm:$0xff]
        %v394 = vld [vmem:[#allocation2 + $0x30] sm:$0xff]
        %v395 = vld [vmem:[#allocation2 + $0x38] sm:$0xff]
        %v396 = vld [vmem:[#allocation2 + $0x40] sm:$0xff]
        %v397 = vld [vmem:[#allocation2 + $0x48] sm:$0xff]
        %v398 = vld [vmem:[#allocation2 + $0x50] sm:$0xff]
        %v399 = vld [vmem:[#allocation2 + $0x58] sm:$0xff]
        %v400 = vld [vmem:[#allocation2 + $0x60] sm:$0xff]
        %v401 = vld [vmem:[#allocation2 + $0x68] sm:$0xff]
        %v402 = vld [vmem:[#allocation2 + $0x70] sm:$0xff]
        %v403 = vld [vmem:[#allocation2 + $0x78] sm:$0xff]
        %v404 = vld [vmem:[%s4] sm:$0x1]
        %v406 = vlaneseq
        %v407 = vshrl.u32 %v406, 7
        %v408 = vsub.s32 0, %v407
        %v409 = vrot.slane %v404, %v408
        %411 = vmatprep.subr.mxu0 0.0
        %412 = vmatpush1.msra.mxu0 %v388
        %413 = vmatprep.subr.mxu0 0.0
        %414 = vmatpush1.msra.mxu0 %v389
        %415 = vmatprep.subr.mxu0 0.0
        %416 = vmatpush1.msra.mxu0 %v390
        %417 = vmatprep.subr.mxu0 0.0
        %418 = vmatpush1.msra.mxu0 %v391
        %419 = vmatprep.subr.mxu0 0.0
        %420 = vmatpush1.msra.mxu0 %v392
        %421 = vmatprep.subr.mxu0 0.0
        %422 = vmatpush1.msra.mxu0 %v393
        %423 = vmatprep.subr.mxu0 0.0
        %424 = vmatpush1.msra.mxu0 %v394
        %425 = vmatprep.subr.mxu0 0.0
        %426 = vmatpush1.msra.mxu0 %v395
        %427 = vmatprep.subr.mxu0 0.0
        %428 = vmatpush1.msra.mxu0 %v396
        %429 = vmatprep.subr.mxu0 0.0
        %430 = vmatpush1.msra.mxu0 %v397
        %431 = vmatprep.subr.mxu0 0.0
        %432 = vmatpush1.msra.mxu0 %v398
        %433 = vmatprep.subr.mxu0 0.0
        %434 = vmatpush1.msra.mxu0 %v399
        %435 = vmatprep.subr.mxu0 0.0
        %436 = vmatpush1.msra.mxu0 %v400
        %437 = vmatprep.subr.mxu0 0.0
        %438 = vmatpush1.msra.mxu0 %v401
        %439 = vmatprep.subr.mxu0 0.0
        %440 = vmatpush1.msra.mxu0 %v402
        %441 = vmatprep.subr.mxu0 0.0
        %442 = vmatpush1.msra.mxu0 %v403
        %443 = vmatprep.subr.mxu0 0.0
        %444 = vmatpush1.msra.mxu0 0.0
        %445 = vmatprep.subr.mxu0 0.0
        %446 = vmatpush1.msra.mxu0 0.0
        %447 = vmatprep.subr.mxu0 0.0
        %448 = vmatpush1.msra.mxu0 0.0
        %449 = vmatprep.subr.mxu0 0.0
        %450 = vmatpush1.msra.mxu0 0.0
        %451 = vmatprep.subr.mxu0 0.0
        %452 = vmatpush1.msra.mxu0 0.0
        %453 = vmatprep.subr.mxu0 0.0
        %454 = vmatpush1.msra.mxu0 0.0
        %455 = vmatprep.subr.mxu0 0.0
        %456 = vmatpush1.msra.mxu0 0.0
        %457 = vmatprep.subr.mxu0 0.0
        %458 = vmatpush1.msra.mxu0 0.0
        %459 = vmatprep.subr.mxu0 0.0
        %460 = vmatpush1.msra.mxu0 0.0
        %461 = vmatprep.subr.mxu0 0.0
        %462 = vmatpush1.msra.mxu0 0.0
        %463 = vmatprep.subr.mxu0 0.0
        %464 = vmatpush1.msra.mxu0 0.0
        %465 = vmatprep.subr.mxu0 0.0
        %466 = vmatpush1.msra.mxu0 0.0
        %467 = vmatprep.subr.mxu0 0.0
        %468 = vmatpush1.msra.mxu0 0.0
        %469 = vmatprep.subr.mxu0 0.0
        %470 = vmatpush1.msra.mxu0 0.0
        %471 = vmatprep.subr.mxu0 0.0
        %472 = vmatpush1.msra.mxu0 0.0
        %473 = vmatprep.subr.mxu0 0.0
        %474 = vmatpush1.msra.mxu0 0.0
        %475 = vmatprep.mubr.f32.mxu0 0.0
        %476 = vmatmul.mubr.f32.gmra.mrb[0].mxu0 %v387
        %v477 = vpop.f32.mrb[0].mxu0
        %v478 = vadd.f32 %v409, %v477
        %v479 = vpop.f32.mrb[0].mxu0
        %480 = vdwg.mxu0
        %v481 = vmax.f32 %v478, 0.0
        %v482 = vld [vmem:[#allocation5] sm:$0xff]
        %v483 = vld [vmem:[#allocation5 + $0x8] sm:$0xff]
        %v484 = vld [vmem:[#allocation5 + $0x10] sm:$0xff]
        %v485 = vld [vmem:[#allocation5 + $0x18] sm:$0xff]
        %v486 = vld [vmem:[#allocation5 + $0x20] sm:$0xff]
        %v487 = vld [vmem:[#allocation5 + $0x28] sm:$0xff]
        %v488 = vld [vmem:[#allocation5 + $0x30] sm:$0xff]
        %v489 = vld [vmem:[#allocation5 + $0x38] sm:$0xff]
        %v490 = vld [vmem:[#allocation5 + $0x40] sm:$0xff]
        %v491 = vld [vmem:[#allocation5 + $0x48] sm:$0xff]
        %v492 = vld [vmem:[#allocation5 + $0x50] sm:$0xff]
        %v493 = vld [vmem:[#allocation5 + $0x58] sm:$0xff]
        %v494 = vld [vmem:[#allocation5 + $0x60] sm:$0xff]
        %v495 = vld [vmem:[#allocation5 + $0x68] sm:$0xff]
        %v496 = vld [vmem:[#allocation5 + $0x70] sm:$0xff]
        %v497 = vld [vmem:[#allocation5 + $0x78] sm:$0xff]
        %v498 = vld [vmem:[%s6] sm:$0x1]
        %v500 = vlaneseq
        %v501 = vshrl.u32 %v500, 7
        %v502 = vsub.s32 0, %v501
        %v503 = vrot.slane %v498, %v502
        %505 = vmatprep.subr.mxu0 0.0
        %506 = vmatpush1.msra.mxu0 %v482
        %507 = vmatprep.subr.mxu0 0.0
        %508 = vmatpush1.msra.mxu0 %v483
        %509 = vmatprep.subr.mxu0 0.0
        %510 = vmatpush1.msra.mxu0 %v484
        %511 = vmatprep.subr.mxu0 0.0
        %512 = vmatpush1.msra.mxu0 %v485
        %513 = vmatprep.subr.mxu0 0.0
        %514 = vmatpush1.msra.mxu0 %v486
        %515 = vmatprep.subr.mxu0 0.0
        %516 = vmatpush1.msra.mxu0 %v487
        %517 = vmatprep.subr.mxu0 0.0
        %518 = vmatpush1.msra.mxu0 %v488
        %519 = vmatprep.subr.mxu0 0.0
        %520 = vmatpush1.msra.mxu0 %v489
        %521 = vmatprep.subr.mxu0 0.0
        %522 = vmatpush1.msra.mxu0 %v490
        %523 = vmatprep.subr.mxu0 0.0
        %524 = vmatpush1.msra.mxu0 %v491
        %525 = vmatprep.subr.mxu0 0.0
        %526 = vmatpush1.msra.mxu0 %v492
        %527 = vmatprep.subr.mxu0 0.0
        %528 = vmatpush1.msra.mxu0 %v493
        %529 = vmatprep.subr.mxu0 0.0
        %530 = vmatpush1.msra.mxu0 %v494
        %531 = vmatprep.subr.mxu0 0.0
        %532 = vmatpush1.msra.mxu0 %v495
        %533 = vmatprep.subr.mxu0 0.0
        %534 = vmatpush1.msra.mxu0 %v496
        %535 = vmatprep.subr.mxu0 0.0
        %536 = vmatpush1.msra.mxu0 %v497
        %537 = vmatprep.subr.mxu0 0.0
        %538 = vmatpush1.msra.mxu0 0.0
        %539 = vmatprep.subr.mxu0 0.0
        %540 = vmatpush1.msra.mxu0 0.0
        %541 = vmatprep.subr.mxu0 0.0
        %542 = vmatpush1.msra.mxu0 0.0
        %543 = vmatprep.subr.mxu0 0.0
        %544 = vmatpush1.msra.mxu0 0.0
        %545 = vmatprep.subr.mxu0 0.0
        %546 = vmatpush1.msra.mxu0 0.0
        %547 = vmatprep.subr.mxu0 0.0
        %548 = vmatpush1.msra.mxu0 0.0
        %549 = vmatprep.subr.mxu0 0.0
        %550 = vmatpush1.msra.mxu0 0.0
        %551 = vmatprep.subr.mxu0 0.0
        %552 = vmatpush1.msra.mxu0 0.0
        %553 = vmatprep.subr.mxu0 0.0
        %554 = vmatpush1.msra.mxu0 0.0
        %555 = vmatprep.subr.mxu0 0.0
        %556 = vmatpush1.msra.mxu0 0.0
        %557 = vmatprep.subr.mxu0 0.0
        %558 = vmatpush1.msra.mxu0 0.0
        %559 = vmatprep.subr.mxu0 0.0
        %560 = vmatpush1.msra.mxu0 0.0
        %561 = vmatprep.subr.mxu0 0.0
        %562 = vmatpush1.msra.mxu0 0.0
        %563 = vmatprep.subr.mxu0 0.0
        %564 = vmatpush1.msra.mxu0 0.0
        %565 = vmatprep.subr.mxu0 0.0
        %566 = vmatpush1.msra.mxu0 0.0
        %567 = vmatprep.subr.mxu0 0.0
        %568 = vmatpush1.msra.mxu0 0.0
        %569 = vmatprep.mubr.f32.mxu0 0.0
        %570 = vmatmul.mubr.f32.gmra.mrb[0].mxu0 %v481
        %v571 = vpop.f32.mrb[0].mxu0
        %v572 = vadd.f32 %v503, %v571
        %v573 = vpop.f32.mrb[0].mxu0
        %574 = vdwg.mxu0
        %575 = vst [vmem:[%s299] sm:$0xff] %v572
        %s576 = sand.u32 %s183, 1
        %s577 = scalar_lea.sflag [#allocation4], %s576
        %s578 = sand.u32 %s183, 1
        %s579 = smul.addr %s578, 8
        %s580 = scalar_lea.vmem [#allocation7], %s579
        // Predicated region
        $region57: #{tpu_custom_call.1} parent=47 // pred_check
          %p581 = pneg %p193
        $region58: #{tpu_custom_call.1} parent=47 // pred_check_branch
          %583 = sbr.rel (%p581) target = $region60
        $region59: #{tpu_custom_call.1} parent=47 // pred_region
          %s585 = ssub.s32 128, 128
          %586 = vsyncadd %s577, %s585
          %s587 = smul.addr %s23, 128
          %s588 = scalar_lea.hbm %s7, %s587
          %s590 = sshll.u32 %s580, 4
          %s591 = int_to_ptr.vmem [resolvable:$true] %s590
          %593 = dma.vmem_to_hbm [thread:$0]  %s591, 128, %s588, %s577
        $region60: #{tpu_custom_call.1} parent=47 // pred_fallthru
          _
      $region48: #{tpu_custom_call.1} parent=5 // pred_fallthru
        _
      %p594 = scmp.le.s32.totalorder 2, %s18
      // Predicated region
      $region61: #{tpu_custom_call.1} parent=5 // pred_check
        %p595 = pneg %p594
      $region62: #{tpu_custom_call.1} parent=5 // pred_check_branch
        %597 = sbr.rel (%p595) target = $region64
      $region63: #{tpu_custom_call.1} parent=5 // pred_region
        %s598 = ssub.s32 %s18, 2
        // Predicated region
        $region65: #{tpu_custom_call.1} parent=63 // pred_check
          %p599 = pneg %p199
        $region66: #{tpu_custom_call.1} parent=63 // pred_check_branch
          %601 = sbr.rel (%p599) target = $region68
        $region67: #{tpu_custom_call.1} parent=63 // pred_region
          %s602 = sand.u32 %s184, 1
          %s603 = scalar_lea.sflag [#allocation4], %s602
          %s604 = sand.u32 %s184, 1
          %s605 = smul.addr %s604, 8
          %s606 = scalar_lea.vmem [#allocation7], %s605
          %607 = dma.done %s603, 128
        $region68: #{tpu_custom_call.1} parent=63 // pred_fallthru
          _
      $region64: #{tpu_custom_call.1} parent=5 // pred_fallthru
        _
    $region6: #{tpu_custom_call.1} parent=1 // loop_footer
      %s22 = sadd.s32 1, %s18
    $region7: #{tpu_custom_call.1} parent=1 // loop_footer_branch
      %17 = sbr.rel target = $region3
    $region8: #{tpu_custom_call.1} parent=1 // loop_exit
      _
    %608 = vsyncpa [#allocation3], 1
    %s609 = scalar_lea.sflag [#allocation3], 1
    %610 = vsyncpa %s609, 1
    %611 = vsyncpa [#allocation6], 1
    %612 = vsyncpa [#allocation4], 1
    %s613 = scalar_lea.sflag [#allocation4], 1
    %614 = vsyncpa %s613, 1

</llo_original>
